<compile_context>
chip_gen: v5e
topology: v5e:2x2
jax: 0.10.0
libtpu: 0.0.40
codegen_flags: <defaults>
</compile_context>

<pallas_src>
import jax
import jax.numpy as jnp
from jax.experimental import pallas as pl
from jax.experimental.pallas import tpu as pltpu

NUM_LAYERS = 3


def lstm_disc_kernel(tok_ref, table_ref, whh0_ref,
                     wih1_ref, whh1_ref, b1_ref,
                     wih2_ref, whh2_ref, b2_ref,
                     fcw_ref, fcb_ref,
                     out_ref,
                     hbuf_scr):
    """tok_ref: (T*B, 1) int32 time-major token column.
       table_ref: (V, 4H) = embedding @ W_ih0 + b0 (layer-0 projection folded into table).
       whh{0,1,2}_ref: (H, 4H); wih{1,2}_ref: (H, 4H); b{1,2}_ref: (1, 4H).
       fcw_ref: (1, H); fcb_ref: (1, 1); out_ref: (B, 1).
       hbuf_scr: (T*B, H) VMEM scratch carrying one layer's hidden outputs to the next
       layer's hoisted input-projection GEMM."""
    B = out_ref.shape[0]
    H = whh0_ref.shape[0]
    TB = tok_ref.shape[0]
    T = TB // B
    V = table_ref.shape[0]

    # ---- fused embedding lookup + layer-0 input projection, hoisted out of the loop ----
    # one_hot(tokens) @ (embedding @ W_ih0 + b0)  ==  embedding[tokens] @ W_ih0 + b0,
    # computed for ALL timesteps as a single (TB,V) x (V,4H) MXU GEMM (time-major rows).
    lane_ids = jax.lax.broadcasted_iota(jnp.int32, (TB, V), 1)
    onehot = (tok_ref[...] == lane_ids).astype(jnp.float32)              # (TB, V)
    x_all = jnp.dot(onehot, table_ref[...],
                    preferred_element_type=jnp.float32)                  # (TB, 4H)

    def cell(gates, c_prev):
        # Two whole-vreg EUP passes over the full (B, 4H) gate row, then lane slices.
        sig = jax.nn.sigmoid(gates)
        tnh = jnp.tanh(gates)
        c_new = sig[:, H:2 * H] * c_prev + sig[:, 0:H] * tnh[:, 2 * H:3 * H]
        h_new = sig[:, 3 * H:4 * H] * jnp.tanh(c_new)
        return h_new, c_new

    zeros = jnp.zeros((B, H), jnp.float32)

    def run_layer(x_proj_all, whh, store_h):
        """Serial recurrence for one layer.  x_proj_all already holds x_t @ W_ih + b for
        every timestep, so each step is one (B,H)x(H,4H) dot + gate math."""
        h, c = zeros, zeros
        for t in range(T):                                   # static unroll (T small)
            g = x_proj_all[t * B:(t + 1) * B, :] + jnp.dot(
                h, whh, preferred_element_type=jnp.float32)
            h, c = cell(g, c)
            if store_h:
                # Off-critical-path store feeding the next layer's hoisted GEMM.
                hbuf_scr[t * B:(t + 1) * B, :] = h
        return h

    # ---- layer 0 ----
    run_layer(x_all, whh0_ref[...], store_h=True)

    # ---- layer 1: hoisted input projection over all timesteps, then recurrence ----
    x_all = jnp.dot(hbuf_scr[...], wih1_ref[...],
                    preferred_element_type=jnp.float32) + b1_ref[...]
    run_layer(x_all, whh1_ref[...], store_h=True)

    # ---- layer 2 ----
    x_all = jnp.dot(hbuf_scr[...], wih2_ref[...],
                    preferred_element_type=jnp.float32) + b2_ref[...]
    h_last = run_layer(x_all, whh2_ref[...], store_h=False)

    # Final Linear(H, 1) as a VPU multiply + lane reduction.
    out_ref[...] = (jnp.sum(h_last * fcw_ref[...], axis=-1, keepdims=True)
                    + fcb_ref[...])


@jax.jit
def discriminator_forward(tokens, params):
    """tokens: (B, T) int32 -> logits (B,) float32."""
    B, T = tokens.shape
    H = params["whh0"].shape[0]

    # Parameter preprocessing (tiny, hoistable under jit): fold the layer-0 input
    # projection and bias into the embedding table; transpose fc weight into a row.
    table = jnp.dot(params["embedding"].astype(jnp.float32), params["wih0"]) + params["b0"]
    fcw_row = params["fc_w"].T                                          # (1, H)

    # Time-major flattened token column (only activation-path glue left in the wrapper).
    tok_col = tokens.T.reshape(T * B, 1).astype(jnp.int32)

    vmem = pl.BlockSpec(memory_space=pltpu.MemorySpace.VMEM)
    out = pl.pallas_call(
        lstm_disc_kernel,
        out_shape=jax.ShapeDtypeStruct((B, 1), jnp.float32),
        in_specs=[vmem] * 11,
        out_specs=vmem,
        scratch_shapes=[pltpu.VMEM((T * B, H), jnp.float32)],   # inter-layer activations
    )(tok_col, table, params["whh0"],
      params["wih1"], params["whh1"], params["b1"],
      params["wih2"], params["whh2"], params["b2"],
      fcw_row, params["fc_b"])
    return out[:, 0]                                            # squeeze(-1)


def make_params(key, vocab_size, embedding_dim, hidden_dim):
    """Deterministic synthetic parameters matching nn.Embedding / nn.LSTM / nn.Linear shapes
    (weights stored transposed vs PyTorch: W_ih as (in, 4H), W_hh as (H, 4H))."""
    ks = jax.random.split(key, 16)
    H = hidden_dim
    scale = 1.0 / jnp.sqrt(jnp.float32(H))

    def u(k, shape):
        return jax.random.uniform(k, shape, jnp.float32, -scale, scale)

    return {
        "embedding": jax.random.normal(ks[0], (vocab_size, embedding_dim), jnp.float32),
        # layer 0: input dim = embedding_dim
        "wih0": u(ks[1], (embedding_dim, 4 * H)),
        "whh0": u(ks[2], (H, 4 * H)),
        "b0":   u(ks[3], (1, 4 * H)) + u(ks[4], (1, 4 * H)),   # b_ih + b_hh
        # layers 1,2: input dim = H
        "wih1": u(ks[5], (H, 4 * H)),
        "whh1": u(ks[6], (H, 4 * H)),
        "b1":   u(ks[7], (1, 4 * H)) + u(ks[8], (1, 4 * H)),
        "wih2": u(ks[9], (H, 4 * H)),
        "whh2": u(ks[10], (H, 4 * H)),
        "b2":   u(ks[11], (1, 4 * H)) + u(ks[12], (1, 4 * H)),
        # fc: Linear(H, 1)
        "fc_w": u(ks[13], (H, 1)),
        "fc_b": u(ks[14], (1, 1)),
    }


def reference_forward(tokens, params):
    """Pure-JAX reference mirroring torch semantics (embedding -> LSTM -> hidden[-1] -> fc),
    deliberately written with the UNFUSED, step-major parameterization to validate the
    kernel's fusions and layer-at-a-time restructure."""
    emb = jnp.take(params["embedding"], tokens, axis=0).astype(jnp.float32)
    B, T = tokens.shape
    H = params["fc_w"].shape[0]
    hs = [jnp.zeros((B, H), jnp.float32) for _ in range(NUM_LAYERS)]
    cs = [jnp.zeros((B, H), jnp.float32) for _ in range(NUM_LAYERS)]
    Ws = [(params["wih0"], params["whh0"], params["b0"]),
          (params["wih1"], params["whh1"], params["b1"]),
          (params["wih2"], params["whh2"], params["b2"])]
    for t in range(T):
        inp = emb[:, t, :]
        for l, (wih, whh, b) in enumerate(Ws):
            gates = inp @ wih + hs[l] @ whh + b
            i = jax.nn.sigmoid(gates[:, 0:H])
            f = jax.nn.sigmoid(gates[:, H:2 * H])
            g = jnp.tanh(gates[:, 2 * H:3 * H])
            o = jax.nn.sigmoid(gates[:, 3 * H:4 * H])
            cs[l] = f * cs[l] + i * g
            hs[l] = o * jnp.tanh(cs[l])
            inp = hs[l]
    return (hs[-1] @ params["fc_w"] + params["fc_b"])[:, 0]


if __name__ == "__main__":
    # Small shapes consistent with the module: vocab=20, embed=16, hidden=32, B=8, T=8
    vocab_size, embedding_dim, hidden_dim = 20, 16, 32
    B, T = 8, 8

    key = jax.random.PRNGKey(0)
    k_par, k_tok = jax.random.split(key)
    params = make_params(k_par, vocab_size, embedding_dim, hidden_dim)
    tokens = jax.random.randint(k_tok, (B, T), 0, vocab_size, dtype=jnp.int32)

    logits = discriminator_forward(tokens, params)
    jax.block_until_ready(logits)

    ref = reference_forward(tokens, params)
    assert logits.shape == (B,), logits.shape
    assert jnp.allclose(logits, ref, atol=1e-4, rtol=1e-4), (logits, ref)

    print("KERNEL_OK")
</pallas_src>

<mosaic_0001>
module attributes {stable_mosaic.version = 11 : i64} {
  func.func @lstm_disc_kernel(%arg0: memref<64x1xi32, #tpu.memory_space<vmem>>, %arg1: memref<20x128xf32, #tpu.memory_space<vmem>>, %arg2: memref<32x128xf32, #tpu.memory_space<vmem>>, %arg3: memref<32x128xf32, #tpu.memory_space<vmem>>, %arg4: memref<32x128xf32, #tpu.memory_space<vmem>>, %arg5: memref<1x128xf32, #tpu.memory_space<vmem>>, %arg6: memref<32x128xf32, #tpu.memory_space<vmem>>, %arg7: memref<32x128xf32, #tpu.memory_space<vmem>>, %arg8: memref<1x128xf32, #tpu.memory_space<vmem>>, %arg9: memref<1x32xf32, #tpu.memory_space<vmem>>, %arg10: memref<1x1xf32, #tpu.memory_space<vmem>>, %arg11: memref<8x1xf32, #tpu.memory_space<vmem>>, %arg12: memref<64x32xf32, #tpu.memory_space<vmem>>) attributes {dimension_semantics = [], scalar_prefetch = 0 : i64, scratch_operands = 1 : i64, tpu.core_type = #tpu.core_type<tc>} {
    %0 = tpu.iota {dimensions = array<i32: 1>} : vector<64x20xi32>
    %c0 = arith.constant 0 : index
    %c0_0 = arith.constant 0 : index
    %1 = vector.load %arg0[%c0, %c0_0] : memref<64x1xi32, #tpu.memory_space<vmem>>, vector<64x1xi32>
    %2 = vector.broadcast %1 : vector<64x1xi32> to vector<64x20xi32>
    %3 = arith.cmpi eq, %2, %0 : vector<64x20xi32>
    %4 = arith.extui %3 : vector<64x20xi1> to vector<64x20xi32>
    %5 = arith.sitofp %4 : vector<64x20xi32> to vector<64x20xf32>
    %c0_1 = arith.constant 0 : index
    %c0_2 = arith.constant 0 : index
    %6 = vector.load %arg1[%c0_1, %c0_2] : memref<20x128xf32, #tpu.memory_space<vmem>>, vector<20x128xf32>
    %cst = arith.constant dense<0.000000e+00> : vector<64x128xf32>
    %7 = tpu.matmul %5, %6, %cst {dimension_numbers = #tpu.dot_dimension_numbers<[1], [0], [0], [1], [0, 0, 1, 1], [], []>} : vector<64x20xf32>, vector<20x128xf32>, vector<64x128xf32> -> vector<64x128xf32>
    %cst_3 = arith.constant 0.000000e+00 : f32
    %8 = vector.broadcast %cst_3 : f32 to vector<8x32xf32>
    %c0_4 = arith.constant 0 : index
    %c0_5 = arith.constant 0 : index
    %9 = vector.load %arg2[%c0_4, %c0_5] : memref<32x128xf32, #tpu.memory_space<vmem>>, vector<32x128xf32>
    %10 = vector.extract_strided_slice %7 {offsets = [0, 0], sizes = [8, 128], strides = [1, 1]} : vector<64x128xf32> to vector<8x128xf32>
    %cst_6 = arith.constant dense<0.000000e+00> : vector<8x128xf32>
    %11 = tpu.matmul %8, %9, %cst_6 {dimension_numbers = #tpu.dot_dimension_numbers<[1], [0], [0], [1], [0, 0, 1, 1], [], []>} : vector<8x32xf32>, vector<32x128xf32>, vector<8x128xf32> -> vector<8x128xf32>
    %12 = arith.addf %10, %11 : vector<8x128xf32>
    %13 = arith.negf %12 : vector<8x128xf32>
    %14 = math.exp %13 : vector<8x128xf32>
    %cst_7 = arith.constant 1.000000e+00 : f32
    %15 = vector.broadcast %cst_7 : f32 to vector<8x128xf32>
    %16 = arith.addf %15, %14 : vector<8x128xf32>
    %17 = arith.divf %15, %16 : vector<8x128xf32>
    %18 = math.tanh %12 : vector<8x128xf32>
    %19 = vector.extract_strided_slice %17 {offsets = [0, 32], sizes = [8, 32], strides = [1, 1]} : vector<8x128xf32> to vector<8x32xf32>
    %20 = arith.mulf %19, %8 : vector<8x32xf32>
    %21 = vector.extract_strided_slice %17 {offsets = [0, 0], sizes = [8, 32], strides = [1, 1]} : vector<8x128xf32> to vector<8x32xf32>
    %22 = vector.extract_strided_slice %18 {offsets = [0, 64], sizes = [8, 32], strides = [1, 1]} : vector<8x128xf32> to vector<8x32xf32>
    %23 = arith.mulf %21, %22 : vector<8x32xf32>
    %24 = arith.addf %20, %23 : vector<8x32xf32>
    %25 = vector.extract_strided_slice %17 {offsets = [0, 96], sizes = [8, 32], strides = [1, 1]} : vector<8x128xf32> to vector<8x32xf32>
    %26 = math.tanh %24 : vector<8x32xf32>
    %27 = arith.mulf %25, %26 : vector<8x32xf32>
    %c0_8 = arith.constant 0 : index
    %c0_9 = arith.constant 0 : index
    %28 = vector.load %arg12[%c0_8, %c0_9] : memref<64x32xf32, #tpu.memory_space<vmem>>, vector<8x32xf32>
    tpu.vector_store %arg12[%c0_8, %c0_9], %27 {strides = array<i32>} : memref<64x32xf32, #tpu.memory_space<vmem>>, vector<8x32xf32>,
    %29 = vector.extract_strided_slice %7 {offsets = [8, 0], sizes = [8, 128], strides = [1, 1]} : vector<64x128xf32> to vector<8x128xf32>
    %cst_10 = arith.constant dense<0.000000e+00> : vector<8x128xf32>
    %30 = tpu.matmul %27, %9, %cst_10 {dimension_numbers = #tpu.dot_dimension_numbers<[1], [0], [0], [1], [0, 0, 1, 1], [], []>} : vector<8x32xf32>, vector<32x128xf32>, vector<8x128xf32> -> vector<8x128xf32>
    %31 = arith.addf %29, %30 : vector<8x128xf32>
    %32 = arith.negf %31 : vector<8x128xf32>
    %33 = math.exp %32 : vector<8x128xf32>
    %cst_11 = arith.constant 1.000000e+00 : f32
    %34 = vector.broadcast %cst_11 : f32 to vector<8x128xf32>
    %35 = arith.addf %34, %33 : vector<8x128xf32>
    %36 = arith.divf %34, %35 : vector<8x128xf32>
    %37 = math.tanh %31 : vector<8x128xf32>
    %38 = vector.extract_strided_slice %36 {offsets = [0, 32], sizes = [8, 32], strides = [1, 1]} : vector<8x128xf32> to vector<8x32xf32>
    %39 = arith.mulf %38, %24 : vector<8x32xf32>
    %40 = vector.extract_strided_slice %36 {offsets = [0, 0], sizes = [8, 32], strides = [1, 1]} : vector<8x128xf32> to vector<8x32xf32>
    %41 = vector.extract_strided_slice %37 {offsets = [0, 64], sizes = [8, 32], strides = [1, 1]} : vector<8x128xf32> to vector<8x32xf32>
    %42 = arith.mulf %40, %41 : vector<8x32xf32>
    %43 = arith.addf %39, %42 : vector<8x32xf32>
    %44 = vector.extract_strided_slice %36 {offsets = [0, 96], sizes = [8, 32], strides = [1, 1]} : vector<8x128xf32> to vector<8x32xf32>
    %45 = math.tanh %43 : vector<8x32xf32>
    %46 = arith.mulf %44, %45 : vector<8x32xf32>
    %c8 = arith.constant 8 : index
    %c0_12 = arith.constant 0 : index
    %47 = vector.load %arg12[%c8, %c0_12] : memref<64x32xf32, #tpu.memory_space<vmem>>, vector<8x32xf32>
    tpu.vector_store %arg12[%c8, %c0_12], %46 {strides = array<i32>} : memref<64x32xf32, #tpu.memory_space<vmem>>, vector<8x32xf32>,
    %48 = vector.extract_strided_slice %7 {offsets = [16, 0], sizes = [8, 128], strides = [1, 1]} : vector<64x128xf32> to vector<8x128xf32>
    %cst_13 = arith.constant dense<0.000000e+00> : vector<8x128xf32>
    %49 = tpu.matmul %46, %9, %cst_13 {dimension_numbers = #tpu.dot_dimension_numbers<[1], [0], [0], [1], [0, 0, 1, 1], [], []>} : vector<8x32xf32>, vector<32x128xf32>, vector<8x128xf32> -> vector<8x128xf32>
    %50 = arith.addf %48, %49 : vector<8x128xf32>
    %51 = arith.negf %50 : vector<8x128xf32>
    %52 = math.exp %51 : vector<8x128xf32>
    %cst_14 = arith.constant 1.000000e+00 : f32
    %53 = vector.broadcast %cst_14 : f32 to vector<8x128xf32>
    %54 = arith.addf %53, %52 : vector<8x128xf32>
    %55 = arith.divf %53, %54 : vector<8x128xf32>
    %56 = math.tanh %50 : vector<8x128xf32>
    %57 = vector.extract_strided_slice %55 {offsets = [0, 32], sizes = [8, 32], strides = [1, 1]} : vector<8x128xf32> to vector<8x32xf32>
    %58 = arith.mulf %57, %43 : vector<8x32xf32>
    %59 = vector.extract_strided_slice %55 {offsets = [0, 0], sizes = [8, 32], strides = [1, 1]} : vector<8x128xf32> to vector<8x32xf32>
    %60 = vector.extract_strided_slice %56 {offsets = [0, 64], sizes = [8, 32], strides = [1, 1]} : vector<8x128xf32> to vector<8x32xf32>
    %61 = arith.mulf %59, %60 : vector<8x32xf32>
    %62 = arith.addf %58, %61 : vector<8x32xf32>
    %63 = vector.extract_strided_slice %55 {offsets = [0, 96], sizes = [8, 32], strides = [1, 1]} : vector<8x128xf32> to vector<8x32xf32>
    %64 = math.tanh %62 : vector<8x32xf32>
    %65 = arith.mulf %63, %64 : vector<8x32xf32>
    %c16 = arith.constant 16 : index
    %c0_15 = arith.constant 0 : index
    %66 = vector.load %arg12[%c16, %c0_15] : memref<64x32xf32, #tpu.memory_space<vmem>>, vector<8x32xf32>
    tpu.vector_store %arg12[%c16, %c0_15], %65 {strides = array<i32>} : memref<64x32xf32, #tpu.memory_space<vmem>>, vector<8x32xf32>,
    %67 = vector.extract_strided_slice %7 {offsets = [24, 0], sizes = [8, 128], strides = [1, 1]} : vector<64x128xf32> to vector<8x128xf32>
    %cst_16 = arith.constant dense<0.000000e+00> : vector<8x128xf32>
    %68 = tpu.matmul %65, %9, %cst_16 {dimension_numbers = #tpu.dot_dimension_numbers<[1], [0], [0], [1], [0, 0, 1, 1], [], []>} : vector<8x32xf32>, vector<32x128xf32>, vector<8x128xf32> -> vector<8x128xf32>
    %69 = arith.addf %67, %68 : vector<8x128xf32>
    %70 = arith.negf %69 : vector<8x128xf32>
    %71 = math.exp %70 : vector<8x128xf32>
    %cst_17 = arith.constant 1.000000e+00 : f32
    %72 = vector.broadcast %cst_17 : f32 to vector<8x128xf32>
    %73 = arith.addf %72, %71 : vector<8x128xf32>
    %74 = arith.divf %72, %73 : vector<8x128xf32>
    %75 = math.tanh %69 : vector<8x128xf32>
    %76 = vector.extract_strided_slice %74 {offsets = [0, 32], sizes = [8, 32], strides = [1, 1]} : vector<8x128xf32> to vector<8x32xf32>
    %77 = arith.mulf %76, %62 : vector<8x32xf32>
    %78 = vector.extract_strided_slice %74 {offsets = [0, 0], sizes = [8, 32], strides = [1, 1]} : vector<8x128xf32> to vector<8x32xf32>
    %79 = vector.extract_strided_slice %75 {offsets = [0, 64], sizes = [8, 32], strides = [1, 1]} : vector<8x128xf32> to vector<8x32xf32>
    %80 = arith.mulf %78, %79 : vector<8x32xf32>
    %81 = arith.addf %77, %80 : vector<8x32xf32>
    %82 = vector.extract_strided_slice %74 {offsets = [0, 96], sizes = [8, 32], strides = [1, 1]} : vector<8x128xf32> to vector<8x32xf32>
    %83 = math.tanh %81 : vector<8x32xf32>
    %84 = arith.mulf %82, %83 : vector<8x32xf32>
    %c24 = arith.constant 24 : index
    %c0_18 = arith.constant 0 : index
    %85 = vector.load %arg12[%c24, %c0_18] : memref<64x32xf32, #tpu.memory_space<vmem>>, vector<8x32xf32>
    tpu.vector_store %arg12[%c24, %c0_18], %84 {strides = array<i32>} : memref<64x32xf32, #tpu.memory_space<vmem>>, vector<8x32xf32>,
    %86 = vector.extract_strided_slice %7 {offsets = [32, 0], sizes = [8, 128], strides = [1, 1]} : vector<64x128xf32> to vector<8x128xf32>
    %cst_19 = arith.constant dense<0.000000e+00> : vector<8x128xf32>
    %87 = tpu.matmul %84, %9, %cst_19 {dimension_numbers = #tpu.dot_dimension_numbers<[1], [0], [0], [1], [0, 0, 1, 1], [], []>} : vector<8x32xf32>, vector<32x128xf32>, vector<8x128xf32> -> vector<8x128xf32>
    %88 = arith.addf %86, %87 : vector<8x128xf32>
    %89 = arith.negf %88 : vector<8x128xf32>
    %90 = math.exp %89 : vector<8x128xf32>
    %cst_20 = arith.constant 1.000000e+00 : f32
    %91 = vector.broadcast %cst_20 : f32 to vector<8x128xf32>
    %92 = arith.addf %91, %90 : vector<8x128xf32>
    %93 = arith.divf %91, %92 : vector<8x128xf32>
    %94 = math.tanh %88 : vector<8x128xf32>
    %95 = vector.extract_strided_slice %93 {offsets = [0, 32], sizes = [8, 32], strides = [1, 1]} : vector<8x128xf32> to vector<8x32xf32>
    %96 = arith.mulf %95, %81 : vector<8x32xf32>
    %97 = vector.extract_strided_slice %93 {offsets = [0, 0], sizes = [8, 32], strides = [1, 1]} : vector<8x128xf32> to vector<8x32xf32>
    %98 = vector.extract_strided_slice %94 {offsets = [0, 64], sizes = [8, 32], strides = [1, 1]} : vector<8x128xf32> to vector<8x32xf32>
    %99 = arith.mulf %97, %98 : vector<8x32xf32>
    %100 = arith.addf %96, %99 : vector<8x32xf32>
    %101 = vector.extract_strided_slice %93 {offsets = [0, 96], sizes = [8, 32], strides = [1, 1]} : vector<8x128xf32> to vector<8x32xf32>
    %102 = math.tanh %100 : vector<8x32xf32>
    %103 = arith.mulf %101, %102 : vector<8x32xf32>
    %c32 = arith.constant 32 : index
    %c0_21 = arith.constant 0 : index
    %104 = vector.load %arg12[%c32, %c0_21] : memref<64x32xf32, #tpu.memory_space<vmem>>, vector<8x32xf32>
    tpu.vector_store %arg12[%c32, %c0_21], %103 {strides = array<i32>} : memref<64x32xf32, #tpu.memory_space<vmem>>, vector<8x32xf32>,
    %105 = vector.extract_strided_slice %7 {offsets = [40, 0], sizes = [8, 128], strides = [1, 1]} : vector<64x128xf32> to vector<8x128xf32>
    %cst_22 = arith.constant dense<0.000000e+00> : vector<8x128xf32>
    %106 = tpu.matmul %103, %9, %cst_22 {dimension_numbers = #tpu.dot_dimension_numbers<[1], [0], [0], [1], [0, 0, 1, 1], [], []>} : vector<8x32xf32>, vector<32x128xf32>, vector<8x128xf32> -> vector<8x128xf32>
    %107 = arith.addf %105, %106 : vector<8x128xf32>
    %108 = arith.negf %107 : vector<8x128xf32>
    %109 = math.exp %108 : vector<8x128xf32>
    %cst_23 = arith.constant 1.000000e+00 : f32
    %110 = vector.broadcast %cst_23 : f32 to vector<8x128xf32>
    %111 = arith.addf %110, %109 : vector<8x128xf32>
    %112 = arith.divf %110, %111 : vector<8x128xf32>
    %113 = math.tanh %107 : vector<8x128xf32>
    %114 = vector.extract_strided_slice %112 {offsets = [0, 32], sizes = [8, 32], strides = [1, 1]} : vector<8x128xf32> to vector<8x32xf32>
    %115 = arith.mulf %114, %100 : vector<8x32xf32>
    %116 = vector.extract_strided_slice %112 {offsets = [0, 0], sizes = [8, 32], strides = [1, 1]} : vector<8x128xf32> to vector<8x32xf32>
    %117 = vector.extract_strided_slice %113 {offsets = [0, 64], sizes = [8, 32], strides = [1, 1]} : vector<8x128xf32> to vector<8x32xf32>
    %118 = arith.mulf %116, %117 : vector<8x32xf32>
    %119 = arith.addf %115, %118 : vector<8x32xf32>
    %120 = vector.extract_strided_slice %112 {offsets = [0, 96], sizes = [8, 32], strides = [1, 1]} : vector<8x128xf32> to vector<8x32xf32>
    %121 = math.tanh %119 : vector<8x32xf32>
    %122 = arith.mulf %120, %121 : vector<8x32xf32>
    %c40 = arith.constant 40 : index
    %c0_24 = arith.constant 0 : index
    %123 = vector.load %arg12[%c40, %c0_24] : memref<64x32xf32, #tpu.memory_space<vmem>>, vector<8x32xf32>
    tpu.vector_store %arg12[%c40, %c0_24], %122 {strides = array<i32>} : memref<64x32xf32, #tpu.memory_space<vmem>>, vector<8x32xf32>,
    %124 = vector.extract_strided_slice %7 {offsets = [48, 0], sizes = [8, 128], strides = [1, 1]} : vector<64x128xf32> to vector<8x128xf32>
    %cst_25 = arith.constant dense<0.000000e+00> : vector<8x128xf32>
    %125 = tpu.matmul %122, %9, %cst_25 {dimension_numbers = #tpu.dot_dimension_numbers<[1], [0], [0], [1], [0, 0, 1, 1], [], []>} : vector<8x32xf32>, vector<32x128xf32>, vector<8x128xf32> -> vector<8x128xf32>
    %126 = arith.addf %124, %125 : vector<8x128xf32>
    %127 = arith.negf %126 : vector<8x128xf32>
    %128 = math.exp %127 : vector<8x128xf32>
    %cst_26 = arith.constant 1.000000e+00 : f32
    %129 = vector.broadcast %cst_26 : f32 to vector<8x128xf32>
    %130 = arith.addf %129, %128 : vector<8x128xf32>
    %131 = arith.divf %129, %130 : vector<8x128xf32>
    %132 = math.tanh %126 : vector<8x128xf32>
    %133 = vector.extract_strided_slice %131 {offsets = [0, 32], sizes = [8, 32], strides = [1, 1]} : vector<8x128xf32> to vector<8x32xf32>
    %134 = arith.mulf %133, %119 : vector<8x32xf32>
    %135 = vector.extract_strided_slice %131 {offsets = [0, 0], sizes = [8, 32], strides = [1, 1]} : vector<8x128xf32> to vector<8x32xf32>
    %136 = vector.extract_strided_slice %132 {offsets = [0, 64], sizes = [8, 32], strides = [1, 1]} : vector<8x128xf32> to vector<8x32xf32>
    %137 = arith.mulf %135, %136 : vector<8x32xf32>
    %138 = arith.addf %134, %137 : vector<8x32xf32>
    %139 = vector.extract_strided_slice %131 {offsets = [0, 96], sizes = [8, 32], strides = [1, 1]} : vector<8x128xf32> to vector<8x32xf32>
    %140 = math.tanh %138 : vector<8x32xf32>
    %141 = arith.mulf %139, %140 : vector<8x32xf32>
    %c48 = arith.constant 48 : index
    %c0_27 = arith.constant 0 : index
    %142 = vector.load %arg12[%c48, %c0_27] : memref<64x32xf32, #tpu.memory_space<vmem>>, vector<8x32xf32>
    tpu.vector_store %arg12[%c48, %c0_27], %141 {strides = array<i32>} : memref<64x32xf32, #tpu.memory_space<vmem>>, vector<8x32xf32>,
    %143 = vector.extract_strided_slice %7 {offsets = [56, 0], sizes = [8, 128], strides = [1, 1]} : vector<64x128xf32> to vector<8x128xf32>
    %cst_28 = arith.constant dense<0.000000e+00> : vector<8x128xf32>
    %144 = tpu.matmul %141, %9, %cst_28 {dimension_numbers = #tpu.dot_dimension_numbers<[1], [0], [0], [1], [0, 0, 1, 1], [], []>} : vector<8x32xf32>, vector<32x128xf32>, vector<8x128xf32> -> vector<8x128xf32>
    %145 = arith.addf %143, %144 : vector<8x128xf32>
    %146 = arith.negf %145 : vector<8x128xf32>
    %147 = math.exp %146 : vector<8x128xf32>
    %cst_29 = arith.constant 1.000000e+00 : f32
    %148 = vector.broadcast %cst_29 : f32 to vector<8x128xf32>
    %149 = arith.addf %148, %147 : vector<8x128xf32>
    %150 = arith.divf %148, %149 : vector<8x128xf32>
    %151 = math.tanh %145 : vector<8x128xf32>
    %152 = vector.extract_strided_slice %150 {offsets = [0, 32], sizes = [8, 32], strides = [1, 1]} : vector<8x128xf32> to vector<8x32xf32>
    %153 = arith.mulf %152, %138 : vector<8x32xf32>
    %154 = vector.extract_strided_slice %150 {offsets = [0, 0], sizes = [8, 32], strides = [1, 1]} : vector<8x128xf32> to vector<8x32xf32>
    %155 = vector.extract_strided_slice %151 {offsets = [0, 64], sizes = [8, 32], strides = [1, 1]} : vector<8x128xf32> to vector<8x32xf32>
    %156 = arith.mulf %154, %155 : vector<8x32xf32>
    %157 = arith.addf %153, %156 : vector<8x32xf32>
    %158 = vector.extract_strided_slice %150 {offsets = [0, 96], sizes = [8, 32], strides = [1, 1]} : vector<8x128xf32> to vector<8x32xf32>
    %159 = math.tanh %157 : vector<8x32xf32>
    %160 = arith.mulf %158, %159 : vector<8x32xf32>
    %c56 = arith.constant 56 : index
    %c0_30 = arith.constant 0 : index
    %161 = vector.load %arg12[%c56, %c0_30] : memref<64x32xf32, #tpu.memory_space<vmem>>, vector<8x32xf32>
    tpu.vector_store %arg12[%c56, %c0_30], %160 {strides = array<i32>} : memref<64x32xf32, #tpu.memory_space<vmem>>, vector<8x32xf32>,
    %c0_31 = arith.constant 0 : index
    %c0_32 = arith.constant 0 : index
    %162 = vector.load %arg12[%c0_31, %c0_32] : memref<64x32xf32, #tpu.memory_space<vmem>>, vector<64x32xf32>
    %c0_33 = arith.constant 0 : index
    %c0_34 = arith.constant 0 : index
    %163 = vector.load %arg3[%c0_33, %c0_34] : memref<32x128xf32, #tpu.memory_space<vmem>>, vector<32x128xf32>
    %cst_35 = arith.constant dense<0.000000e+00> : vector<64x128xf32>
    %164 = tpu.matmul %162, %163, %cst_35 {dimension_numbers = #tpu.dot_dimension_numbers<[1], [0], [0], [1], [0, 0, 1, 1], [], []>} : vector<64x32xf32>, vector<32x128xf32>, vector<64x128xf32> -> vector<64x128xf32>
    %c0_36 = arith.constant 0 : index
    %c0_37 = arith.constant 0 : index
    %165 = vector.load %arg5[%c0_36, %c0_37] : memref<1x128xf32, #tpu.memory_space<vmem>>, vector<1x128xf32>
    %166 = vector.broadcast %165 : vector<1x128xf32> to vector<64x128xf32>
    %167 = arith.addf %164, %166 : vector<64x128xf32>
    %c0_38 = arith.constant 0 : index
    %c0_39 = arith.constant 0 : index
    %168 = vector.load %arg4[%c0_38, %c0_39] : memref<32x128xf32, #tpu.memory_space<vmem>>, vector<32x128xf32>
    %169 = vector.extract_strided_slice %167 {offsets = [0, 0], sizes = [8, 128], strides = [1, 1]} : vector<64x128xf32> to vector<8x128xf32>
    %cst_40 = arith.constant dense<0.000000e+00> : vector<8x128xf32>
    %170 = tpu.matmul %8, %168, %cst_40 {dimension_numbers = #tpu.dot_dimension_numbers<[1], [0], [0], [1], [0, 0, 1, 1], [], []>} : vector<8x32xf32>, vector<32x128xf32>, vector<8x128xf32> -> vector<8x128xf32>
    %171 = arith.addf %169, %170 : vector<8x128xf32>
    %172 = arith.negf %171 : vector<8x128xf32>
    %173 = math.exp %172 : vector<8x128xf32>
    %cst_41 = arith.constant 1.000000e+00 : f32
    %174 = vector.broadcast %cst_41 : f32 to vector<8x128xf32>
    %175 = arith.addf %174, %173 : vector<8x128xf32>
    %176 = arith.divf %174, %175 : vector<8x128xf32>
    %177 = math.tanh %171 : vector<8x128xf32>
    %178 = vector.extract_strided_slice %176 {offsets = [0, 32], sizes = [8, 32], strides = [1, 1]} : vector<8x128xf32> to vector<8x32xf32>
    %179 = arith.mulf %178, %8 : vector<8x32xf32>
    %180 = vector.extract_strided_slice %176 {offsets = [0, 0], sizes = [8, 32], strides = [1, 1]} : vector<8x128xf32> to vector<8x32xf32>
    %181 = vector.extract_strided_slice %177 {offsets = [0, 64], sizes = [8, 32], strides = [1, 1]} : vector<8x128xf32> to vector<8x32xf32>
    %182 = arith.mulf %180, %181 : vector<8x32xf32>
    %183 = arith.addf %179, %182 : vector<8x32xf32>
    %184 = vector.extract_strided_slice %176 {offsets = [0, 96], sizes = [8, 32], strides = [1, 1]} : vector<8x128xf32> to vector<8x32xf32>
    %185 = math.tanh %183 : vector<8x32xf32>
    %186 = arith.mulf %184, %185 : vector<8x32xf32>
    %c0_42 = arith.constant 0 : index
    %c0_43 = arith.constant 0 : index
    %187 = vector.load %arg12[%c0_42, %c0_43] : memref<64x32xf32, #tpu.memory_space<vmem>>, vector<8x32xf32>
    tpu.vector_store %arg12[%c0_42, %c0_43], %186 {strides = array<i32>} : memref<64x32xf32, #tpu.memory_space<vmem>>, vector<8x32xf32>,
    %188 = vector.extract_strided_slice %167 {offsets = [8, 0], sizes = [8, 128], strides = [1, 1]} : vector<64x128xf32> to vector<8x128xf32>
    %cst_44 = arith.constant dense<0.000000e+00> : vector<8x128xf32>
    %189 = tpu.matmul %186, %168, %cst_44 {dimension_numbers = #tpu.dot_dimension_numbers<[1], [0], [0], [1], [0, 0, 1, 1], [], []>} : vector<8x32xf32>, vector<32x128xf32>, vector<8x128xf32> -> vector<8x128xf32>
    %190 = arith.addf %188, %189 : vector<8x128xf32>
    %191 = arith.negf %190 : vector<8x128xf32>
    %192 = math.exp %191 : vector<8x128xf32>
    %cst_45 = arith.constant 1.000000e+00 : f32
    %193 = vector.broadcast %cst_45 : f32 to vector<8x128xf32>
    %194 = arith.addf %193, %192 : vector<8x128xf32>
    %195 = arith.divf %193, %194 : vector<8x128xf32>
    %196 = math.tanh %190 : vector<8x128xf32>
    %197 = vector.extract_strided_slice %195 {offsets = [0, 32], sizes = [8, 32], strides = [1, 1]} : vector<8x128xf32> to vector<8x32xf32>
    %198 = arith.mulf %197, %183 : vector<8x32xf32>
    %199 = vector.extract_strided_slice %195 {offsets = [0, 0], sizes = [8, 32], strides = [1, 1]} : vector<8x128xf32> to vector<8x32xf32>
    %200 = vector.extract_strided_slice %196 {offsets = [0, 64], sizes = [8, 32], strides = [1, 1]} : vector<8x128xf32> to vector<8x32xf32>
    %201 = arith.mulf %199, %200 : vector<8x32xf32>
    %202 = arith.addf %198, %201 : vector<8x32xf32>
    %203 = vector.extract_strided_slice %195 {offsets = [0, 96], sizes = [8, 32], strides = [1, 1]} : vector<8x128xf32> to vector<8x32xf32>
    %204 = math.tanh %202 : vector<8x32xf32>
    %205 = arith.mulf %203, %204 : vector<8x32xf32>
    %c8_46 = arith.constant 8 : index
    %c0_47 = arith.constant 0 : index
    %206 = vector.load %arg12[%c8_46, %c0_47] : memref<64x32xf32, #tpu.memory_space<vmem>>, vector<8x32xf32>
    tpu.vector_store %arg12[%c8_46, %c0_47], %205 {strides = array<i32>} : memref<64x32xf32, #tpu.memory_space<vmem>>, vector<8x32xf32>,
    %207 = vector.extract_strided_slice %167 {offsets = [16, 0], sizes = [8, 128], strides = [1, 1]} : vector<64x128xf32> to vector<8x128xf32>
    %cst_48 = arith.constant dense<0.000000e+00> : vector<8x128xf32>
    %208 = tpu.matmul %205, %168, %cst_48 {dimension_numbers = #tpu.dot_dimension_numbers<[1], [0], [0], [1], [0, 0, 1, 1], [], []>} : vector<8x32xf32>, vector<32x128xf32>, vector<8x128xf32> -> vector<8x128xf32>
    %209 = arith.addf %207, %208 : vector<8x128xf32>
    %210 = arith.negf %209 : vector<8x128xf32>
    %211 = math.exp %210 : vector<8x128xf32>
    %cst_49 = arith.constant 1.000000e+00 : f32
    %212 = vector.broadcast %cst_49 : f32 to vector<8x128xf32>
    %213 = arith.addf %212, %211 : vector<8x128xf32>
    %214 = arith.divf %212, %213 : vector<8x128xf32>
    %215 = math.tanh %209 : vector<8x128xf32>
    %216 = vector.extract_strided_slice %214 {offsets = [0, 32], sizes = [8, 32], strides = [1, 1]} : vector<8x128xf32> to vector<8x32xf32>
    %217 = arith.mulf %216, %202 : vector<8x32xf32>
    %218 = vector.extract_strided_slice %214 {offsets = [0, 0], sizes = [8, 32], strides = [1, 1]} : vector<8x128xf32> to vector<8x32xf32>
    %219 = vector.extract_strided_slice %215 {offsets = [0, 64], sizes = [8, 32], strides = [1, 1]} : vector<8x128xf32> to vector<8x32xf32>
    %220 = arith.mulf %218, %219 : vector<8x32xf32>
    %221 = arith.addf %217, %220 : vector<8x32xf32>
    %222 = vector.extract_strided_slice %214 {offsets = [0, 96], sizes = [8, 32], strides = [1, 1]} : vector<8x128xf32> to vector<8x32xf32>
    %223 = math.tanh %221 : vector<8x32xf32>
    %224 = arith.mulf %222, %223 : vector<8x32xf32>
    %c16_50 = arith.constant 16 : index
    %c0_51 = arith.constant 0 : index
    %225 = vector.load %arg12[%c16_50, %c0_51] : memref<64x32xf32, #tpu.memory_space<vmem>>, vector<8x32xf32>
    tpu.vector_store %arg12[%c16_50, %c0_51], %224 {strides = array<i32>} : memref<64x32xf32, #tpu.memory_space<vmem>>, vector<8x32xf32>,
    %226 = vector.extract_strided_slice %167 {offsets = [24, 0], sizes = [8, 128], strides = [1, 1]} : vector<64x128xf32> to vector<8x128xf32>
    %cst_52 = arith.constant dense<0.000000e+00> : vector<8x128xf32>
    %227 = tpu.matmul %224, %168, %cst_52 {dimension_numbers = #tpu.dot_dimension_numbers<[1], [0], [0], [1], [0, 0, 1, 1], [], []>} : vector<8x32xf32>, vector<32x128xf32>, vector<8x128xf32> -> vector<8x128xf32>
    %228 = arith.addf %226, %227 : vector<8x128xf32>
    %229 = arith.negf %228 : vector<8x128xf32>
    %230 = math.exp %229 : vector<8x128xf32>
    %cst_53 = arith.constant 1.000000e+00 : f32
    %231 = vector.broadcast %cst_53 : f32 to vector<8x128xf32>
    %232 = arith.addf %231, %230 : vector<8x128xf32>
    %233 = arith.divf %231, %232 : vector<8x128xf32>
    %234 = math.tanh %228 : vector<8x128xf32>
    %235 = vector.extract_strided_slice %233 {offsets = [0, 32], sizes = [8, 32], strides = [1, 1]} : vector<8x128xf32> to vector<8x32xf32>
    %236 = arith.mulf %235, %221 : vector<8x32xf32>
    %237 = vector.extract_strided_slice %233 {offsets = [0, 0], sizes = [8, 32], strides = [1, 1]} : vector<8x128xf32> to vector<8x32xf32>
    %238 = vector.extract_strided_slice %234 {offsets = [0, 64], sizes = [8, 32], strides = [1, 1]} : vector<8x128xf32> to vector<8x32xf32>
    %239 = arith.mulf %237, %238 : vector<8x32xf32>
    %240 = arith.addf %236, %239 : vector<8x32xf32>
    %241 = vector.extract_strided_slice %233 {offsets = [0, 96], sizes = [8, 32], strides = [1, 1]} : vector<8x128xf32> to vector<8x32xf32>
    %242 = math.tanh %240 : vector<8x32xf32>
    %243 = arith.mulf %241, %242 : vector<8x32xf32>
    %c24_54 = arith.constant 24 : index
    %c0_55 = arith.constant 0 : index
    %244 = vector.load %arg12[%c24_54, %c0_55] : memref<64x32xf32, #tpu.memory_space<vmem>>, vector<8x32xf32>
    tpu.vector_store %arg12[%c24_54, %c0_55], %243 {strides = array<i32>} : memref<64x32xf32, #tpu.memory_space<vmem>>, vector<8x32xf32>,
    %245 = vector.extract_strided_slice %167 {offsets = [32, 0], sizes = [8, 128], strides = [1, 1]} : vector<64x128xf32> to vector<8x128xf32>
    %cst_56 = arith.constant dense<0.000000e+00> : vector<8x128xf32>
    %246 = tpu.matmul %243, %168, %cst_56 {dimension_numbers = #tpu.dot_dimension_numbers<[1], [0], [0], [1], [0, 0, 1, 1], [], []>} : vector<8x32xf32>, vector<32x128xf32>, vector<8x128xf32> -> vector<8x128xf32>
    %247 = arith.addf %245, %246 : vector<8x128xf32>
    %248 = arith.negf %247 : vector<8x128xf32>
    %249 = math.exp %248 : vector<8x128xf32>
    %cst_57 = arith.constant 1.000000e+00 : f32
    %250 = vector.broadcast %cst_57 : f32 to vector<8x128xf32>
    %251 = arith.addf %250, %249 : vector<8x128xf32>
    %252 = arith.divf %250, %251 : vector<8x128xf32>
    %253 = math.tanh %247 : vector<8x128xf32>
    %254 = vector.extract_strided_slice %252 {offsets = [0, 32], sizes = [8, 32], strides = [1, 1]} : vector<8x128xf32> to vector<8x32xf32>
    %255 = arith.mulf %254, %240 : vector<8x32xf32>
    %256 = vector.extract_strided_slice %252 {offsets = [0, 0], sizes = [8, 32], strides = [1, 1]} : vector<8x128xf32> to vector<8x32xf32>
    %257 = vector.extract_strided_slice %253 {offsets = [0, 64], sizes = [8, 32], strides = [1, 1]} : vector<8x128xf32> to vector<8x32xf32>
    %258 = arith.mulf %256, %257 : vector<8x32xf32>
    %259 = arith.addf %255, %258 : vector<8x32xf32>
    %260 = vector.extract_strided_slice %252 {offsets = [0, 96], sizes = [8, 32], strides = [1, 1]} : vector<8x128xf32> to vector<8x32xf32>
    %261 = math.tanh %259 : vector<8x32xf32>
    %262 = arith.mulf %260, %261 : vector<8x32xf32>
    %c32_58 = arith.constant 32 : index
    %c0_59 = arith.constant 0 : index
    %263 = vector.load %arg12[%c32_58, %c0_59] : memref<64x32xf32, #tpu.memory_space<vmem>>, vector<8x32xf32>
    tpu.vector_store %arg12[%c32_58, %c0_59], %262 {strides = array<i32>} : memref<64x32xf32, #tpu.memory_space<vmem>>, vector<8x32xf32>,
    %264 = vector.extract_strided_slice %167 {offsets = [40, 0], sizes = [8, 128], strides = [1, 1]} : vector<64x128xf32> to vector<8x128xf32>
    %cst_60 = arith.constant dense<0.000000e+00> : vector<8x128xf32>
    %265 = tpu.matmul %262, %168, %cst_60 {dimension_numbers = #tpu.dot_dimension_numbers<[1], [0], [0], [1], [0, 0, 1, 1], [], []>} : vector<8x32xf32>, vector<32x128xf32>, vector<8x128xf32> -> vector<8x128xf32>
    %266 = arith.addf %264, %265 : vector<8x128xf32>
    %267 = arith.negf %266 : vector<8x128xf32>
    %268 = math.exp %267 : vector<8x128xf32>
    %cst_61 = arith.constant 1.000000e+00 : f32
    %269 = vector.broadcast %cst_61 : f32 to vector<8x128xf32>
    %270 = arith.addf %269, %268 : vector<8x128xf32>
    %271 = arith.divf %269, %270 : vector<8x128xf32>
    %272 = math.tanh %266 : vector<8x128xf32>
    %273 = vector.extract_strided_slice %271 {offsets = [0, 32], sizes = [8, 32], strides = [1, 1]} : vector<8x128xf32> to vector<8x32xf32>
    %274 = arith.mulf %273, %259 : vector<8x32xf32>
    %275 = vector.extract_strided_slice %271 {offsets = [0, 0], sizes = [8, 32], strides = [1, 1]} : vector<8x128xf32> to vector<8x32xf32>
    %276 = vector.extract_strided_slice %272 {offsets = [0, 64], sizes = [8, 32], strides = [1, 1]} : vector<8x128xf32> to vector<8x32xf32>
    %277 = arith.mulf %275, %276 : vector<8x32xf32>
    %278 = arith.addf %274, %277 : vector<8x32xf32>
    %279 = vector.extract_strided_slice %271 {offsets = [0, 96], sizes = [8, 32], strides = [1, 1]} : vector<8x128xf32> to vector<8x32xf32>
    %280 = math.tanh %278 : vector<8x32xf32>
    %281 = arith.mulf %279, %280 : vector<8x32xf32>
    %c40_62 = arith.constant 40 : index
    %c0_63 = arith.constant 0 : index
    %282 = vector.load %arg12[%c40_62, %c0_63] : memref<64x32xf32, #tpu.memory_space<vmem>>, vector<8x32xf32>
    tpu.vector_store %arg12[%c40_62, %c0_63], %281 {strides = array<i32>} : memref<64x32xf32, #tpu.memory_space<vmem>>, vector<8x32xf32>,
    %283 = vector.extract_strided_slice %167 {offsets = [48, 0], sizes = [8, 128], strides = [1, 1]} : vector<64x128xf32> to vector<8x128xf32>
    %cst_64 = arith.constant dense<0.000000e+00> : vector<8x128xf32>
    %284 = tpu.matmul %281, %168, %cst_64 {dimension_numbers = #tpu.dot_dimension_numbers<[1], [0], [0], [1], [0, 0, 1, 1], [], []>} : vector<8x32xf32>, vector<32x128xf32>, vector<8x128xf32> -> vector<8x128xf32>
    %285 = arith.addf %283, %284 : vector<8x128xf32>
    %286 = arith.negf %285 : vector<8x128xf32>
    %287 = math.exp %286 : vector<8x128xf32>
    %cst_65 = arith.constant 1.000000e+00 : f32
    %288 = vector.broadcast %cst_65 : f32 to vector<8x128xf32>
    %289 = arith.addf %288, %287 : vector<8x128xf32>
    %290 = arith.divf %288, %289 : vector<8x128xf32>
    %291 = math.tanh %285 : vector<8x128xf32>
    %292 = vector.extract_strided_slice %290 {offsets = [0, 32], sizes = [8, 32], strides = [1, 1]} : vector<8x128xf32> to vector<8x32xf32>
    %293 = arith.mulf %292, %278 : vector<8x32xf32>
    %294 = vector.extract_strided_slice %290 {offsets = [0, 0], sizes = [8, 32], strides = [1, 1]} : vector<8x128xf32> to vector<8x32xf32>
    %295 = vector.extract_strided_slice %291 {offsets = [0, 64], sizes = [8, 32], strides = [1, 1]} : vector<8x128xf32> to vector<8x32xf32>
    %296 = arith.mulf %294, %295 : vector<8x32xf32>
    %297 = arith.addf %293, %296 : vector<8x32xf32>
    %298 = vector.extract_strided_slice %290 {offsets = [0, 96], sizes = [8, 32], strides = [1, 1]} : vector<8x128xf32> to vector<8x32xf32>
    %299 = math.tanh %297 : vector<8x32xf32>
    %300 = arith.mulf %298, %299 : vector<8x32xf32>
    %c48_66 = arith.constant 48 : index
    %c0_67 = arith.constant 0 : index
    %301 = vector.load %arg12[%c48_66, %c0_67] : memref<64x32xf32, #tpu.memory_space<vmem>>, vector<8x32xf32>
    tpu.vector_store %arg12[%c48_66, %c0_67], %300 {strides = array<i32>} : memref<64x32xf32, #tpu.memory_space<vmem>>, vector<8x32xf32>,
    %302 = vector.extract_strided_slice %167 {offsets = [56, 0], sizes = [8, 128], strides = [1, 1]} : vector<64x128xf32> to vector<8x128xf32>
    %cst_68 = arith.constant dense<0.000000e+00> : vector<8x128xf32>
    %303 = tpu.matmul %300, %168, %cst_68 {dimension_numbers = #tpu.dot_dimension_numbers<[1], [0], [0], [1], [0, 0, 1, 1], [], []>} : vector<8x32xf32>, vector<32x128xf32>, vector<8x128xf32> -> vector<8x128xf32>
    %304 = arith.addf %302, %303 : vector<8x128xf32>
    %305 = arith.negf %304 : vector<8x128xf32>
    %306 = math.exp %305 : vector<8x128xf32>
    %cst_69 = arith.constant 1.000000e+00 : f32
    %307 = vector.broadcast %cst_69 : f32 to vector<8x128xf32>
    %308 = arith.addf %307, %306 : vector<8x128xf32>
    %309 = arith.divf %307, %308 : vector<8x128xf32>
    %310 = math.tanh %304 : vector<8x128xf32>
    %311 = vector.extract_strided_slice %309 {offsets = [0, 32], sizes = [8, 32], strides = [1, 1]} : vector<8x128xf32> to vector<8x32xf32>
    %312 = arith.mulf %311, %297 : vector<8x32xf32>
    %313 = vector.extract_strided_slice %309 {offsets = [0, 0], sizes = [8, 32], strides = [1, 1]} : vector<8x128xf32> to vector<8x32xf32>
    %314 = vector.extract_strided_slice %310 {offsets = [0, 64], sizes = [8, 32], strides = [1, 1]} : vector<8x128xf32> to vector<8x32xf32>
    %315 = arith.mulf %313, %314 : vector<8x32xf32>
    %316 = arith.addf %312, %315 : vector<8x32xf32>
    %317 = vector.extract_strided_slice %309 {offsets = [0, 96], sizes = [8, 32], strides = [1, 1]} : vector<8x128xf32> to vector<8x32xf32>
    %318 = math.tanh %316 : vector<8x32xf32>
    %319 = arith.mulf %317, %318 : vector<8x32xf32>
    %c56_70 = arith.constant 56 : index
    %c0_71 = arith.constant 0 : index
    %320 = vector.load %arg12[%c56_70, %c0_71] : memref<64x32xf32, #tpu.memory_space<vmem>>, vector<8x32xf32>
    tpu.vector_store %arg12[%c56_70, %c0_71], %319 {strides = array<i32>} : memref<64x32xf32, #tpu.memory_space<vmem>>, vector<8x32xf32>,
    %c0_72 = arith.constant 0 : index
    %c0_73 = arith.constant 0 : index
    %321 = vector.load %arg12[%c0_72, %c0_73] : memref<64x32xf32, #tpu.memory_space<vmem>>, vector<64x32xf32>
    %c0_74 = arith.constant 0 : index
    %c0_75 = arith.constant 0 : index
    %322 = vector.load %arg6[%c0_74, %c0_75] : memref<32x128xf32, #tpu.memory_space<vmem>>, vector<32x128xf32>
    %cst_76 = arith.constant dense<0.000000e+00> : vector<64x128xf32>
    %323 = tpu.matmul %321, %322, %cst_76 {dimension_numbers = #tpu.dot_dimension_numbers<[1], [0], [0], [1], [0, 0, 1, 1], [], []>} : vector<64x32xf32>, vector<32x128xf32>, vector<64x128xf32> -> vector<64x128xf32>
    %c0_77 = arith.constant 0 : index
    %c0_78 = arith.constant 0 : index
    %324 = vector.load %arg8[%c0_77, %c0_78] : memref<1x128xf32, #tpu.memory_space<vmem>>, vector<1x128xf32>
    %325 = vector.broadcast %324 : vector<1x128xf32> to vector<64x128xf32>
    %326 = arith.addf %323, %325 : vector<64x128xf32>
    %c0_79 = arith.constant 0 : index
    %c0_80 = arith.constant 0 : index
    %327 = vector.load %arg7[%c0_79, %c0_80] : memref<32x128xf32, #tpu.memory_space<vmem>>, vector<32x128xf32>
    %328 = vector.extract_strided_slice %326 {offsets = [0, 0], sizes = [8, 128], strides = [1, 1]} : vector<64x128xf32> to vector<8x128xf32>
    %cst_81 = arith.constant dense<0.000000e+00> : vector<8x128xf32>
    %329 = tpu.matmul %8, %327, %cst_81 {dimension_numbers = #tpu.dot_dimension_numbers<[1], [0], [0], [1], [0, 0, 1, 1], [], []>} : vector<8x32xf32>, vector<32x128xf32>, vector<8x128xf32> -> vector<8x128xf32>
    %330 = arith.addf %328, %329 : vector<8x128xf32>
    %331 = arith.negf %330 : vector<8x128xf32>
    %332 = math.exp %331 : vector<8x128xf32>
    %cst_82 = arith.constant 1.000000e+00 : f32
    %333 = vector.broadcast %cst_82 : f32 to vector<8x128xf32>
    %334 = arith.addf %333, %332 : vector<8x128xf32>
    %335 = arith.divf %333, %334 : vector<8x128xf32>
    %336 = math.tanh %330 : vector<8x128xf32>
    %337 = vector.extract_strided_slice %335 {offsets = [0, 32], sizes = [8, 32], strides = [1, 1]} : vector<8x128xf32> to vector<8x32xf32>
    %338 = arith.mulf %337, %8 : vector<8x32xf32>
    %339 = vector.extract_strided_slice %335 {offsets = [0, 0], sizes = [8, 32], strides = [1, 1]} : vector<8x128xf32> to vector<8x32xf32>
    %340 = vector.extract_strided_slice %336 {offsets = [0, 64], sizes = [8, 32], strides = [1, 1]} : vector<8x128xf32> to vector<8x32xf32>
    %341 = arith.mulf %339, %340 : vector<8x32xf32>
    %342 = arith.addf %338, %341 : vector<8x32xf32>
    %343 = vector.extract_strided_slice %335 {offsets = [0, 96], sizes = [8, 32], strides = [1, 1]} : vector<8x128xf32> to vector<8x32xf32>
    %344 = math.tanh %342 : vector<8x32xf32>
    %345 = arith.mulf %343, %344 : vector<8x32xf32>
    %346 = vector.extract_strided_slice %326 {offsets = [8, 0], sizes = [8, 128], strides = [1, 1]} : vector<64x128xf32> to vector<8x128xf32>
    %cst_83 = arith.constant dense<0.000000e+00> : vector<8x128xf32>
    %347 = tpu.matmul %345, %327, %cst_83 {dimension_numbers = #tpu.dot_dimension_numbers<[1], [0], [0], [1], [0, 0, 1, 1], [], []>} : vector<8x32xf32>, vector<32x128xf32>, vector<8x128xf32> -> vector<8x128xf32>
    %348 = arith.addf %346, %347 : vector<8x128xf32>
    %349 = arith.negf %348 : vector<8x128xf32>
    %350 = math.exp %349 : vector<8x128xf32>
    %cst_84 = arith.constant 1.000000e+00 : f32
    %351 = vector.broadcast %cst_84 : f32 to vector<8x128xf32>
    %352 = arith.addf %351, %350 : vector<8x128xf32>
    %353 = arith.divf %351, %352 : vector<8x128xf32>
    %354 = math.tanh %348 : vector<8x128xf32>
    %355 = vector.extract_strided_slice %353 {offsets = [0, 32], sizes = [8, 32], strides = [1, 1]} : vector<8x128xf32> to vector<8x32xf32>
    %356 = arith.mulf %355, %342 : vector<8x32xf32>
    %357 = vector.extract_strided_slice %353 {offsets = [0, 0], sizes = [8, 32], strides = [1, 1]} : vector<8x128xf32> to vector<8x32xf32>
    %358 = vector.extract_strided_slice %354 {offsets = [0, 64], sizes = [8, 32], strides = [1, 1]} : vector<8x128xf32> to vector<8x32xf32>
    %359 = arith.mulf %357, %358 : vector<8x32xf32>
    %360 = arith.addf %356, %359 : vector<8x32xf32>
    %361 = vector.extract_strided_slice %353 {offsets = [0, 96], sizes = [8, 32], strides = [1, 1]} : vector<8x128xf32> to vector<8x32xf32>
    %362 = math.tanh %360 : vector<8x32xf32>
    %363 = arith.mulf %361, %362 : vector<8x32xf32>
    %364 = vector.extract_strided_slice %326 {offsets = [16, 0], sizes = [8, 128], strides = [1, 1]} : vector<64x128xf32> to vector<8x128xf32>
    %cst_85 = arith.constant dense<0.000000e+00> : vector<8x128xf32>
    %365 = tpu.matmul %363, %327, %cst_85 {dimension_numbers = #tpu.dot_dimension_numbers<[1], [0], [0], [1], [0, 0, 1, 1], [], []>} : vector<8x32xf32>, vector<32x128xf32>, vector<8x128xf32> -> vector<8x128xf32>
    %366 = arith.addf %364, %365 : vector<8x128xf32>
    %367 = arith.negf %366 : vector<8x128xf32>
    %368 = math.exp %367 : vector<8x128xf32>
    %cst_86 = arith.constant 1.000000e+00 : f32
    %369 = vector.broadcast %cst_86 : f32 to vector<8x128xf32>
    %370 = arith.addf %369, %368 : vector<8x128xf32>
    %371 = arith.divf %369, %370 : vector<8x128xf32>
    %372 = math.tanh %366 : vector<8x128xf32>
    %373 = vector.extract_strided_slice %371 {offsets = [0, 32], sizes = [8, 32], strides = [1, 1]} : vector<8x128xf32> to vector<8x32xf32>
    %374 = arith.mulf %373, %360 : vector<8x32xf32>
    %375 = vector.extract_strided_slice %371 {offsets = [0, 0], sizes = [8, 32], strides = [1, 1]} : vector<8x128xf32> to vector<8x32xf32>
    %376 = vector.extract_strided_slice %372 {offsets = [0, 64], sizes = [8, 32], strides = [1, 1]} : vector<8x128xf32> to vector<8x32xf32>
    %377 = arith.mulf %375, %376 : vector<8x32xf32>
    %378 = arith.addf %374, %377 : vector<8x32xf32>
    %379 = vector.extract_strided_slice %371 {offsets = [0, 96], sizes = [8, 32], strides = [1, 1]} : vector<8x128xf32> to vector<8x32xf32>
    %380 = math.tanh %378 : vector<8x32xf32>
    %381 = arith.mulf %379, %380 : vector<8x32xf32>
    %382 = vector.extract_strided_slice %326 {offsets = [24, 0], sizes = [8, 128], strides = [1, 1]} : vector<64x128xf32> to vector<8x128xf32>
    %cst_87 = arith.constant dense<0.000000e+00> : vector<8x128xf32>
    %383 = tpu.matmul %381, %327, %cst_87 {dimension_numbers = #tpu.dot_dimension_numbers<[1], [0], [0], [1], [0, 0, 1, 1], [], []>} : vector<8x32xf32>, vector<32x128xf32>, vector<8x128xf32> -> vector<8x128xf32>
    %384 = arith.addf %382, %383 : vector<8x128xf32>
    %385 = arith.negf %384 : vector<8x128xf32>
    %386 = math.exp %385 : vector<8x128xf32>
    %cst_88 = arith.constant 1.000000e+00 : f32
    %387 = vector.broadcast %cst_88 : f32 to vector<8x128xf32>
    %388 = arith.addf %387, %386 : vector<8x128xf32>
    %389 = arith.divf %387, %388 : vector<8x128xf32>
    %390 = math.tanh %384 : vector<8x128xf32>
    %391 = vector.extract_strided_slice %389 {offsets = [0, 32], sizes = [8, 32], strides = [1, 1]} : vector<8x128xf32> to vector<8x32xf32>
    %392 = arith.mulf %391, %378 : vector<8x32xf32>
    %393 = vector.extract_strided_slice %389 {offsets = [0, 0], sizes = [8, 32], strides = [1, 1]} : vector<8x128xf32> to vector<8x32xf32>
    %394 = vector.extract_strided_slice %390 {offsets = [0, 64], sizes = [8, 32], strides = [1, 1]} : vector<8x128xf32> to vector<8x32xf32>
    %395 = arith.mulf %393, %394 : vector<8x32xf32>
    %396 = arith.addf %392, %395 : vector<8x32xf32>
    %397 = vector.extract_strided_slice %389 {offsets = [0, 96], sizes = [8, 32], strides = [1, 1]} : vector<8x128xf32> to vector<8x32xf32>
    %398 = math.tanh %396 : vector<8x32xf32>
    %399 = arith.mulf %397, %398 : vector<8x32xf32>
    %400 = vector.extract_strided_slice %326 {offsets = [32, 0], sizes = [8, 128], strides = [1, 1]} : vector<64x128xf32> to vector<8x128xf32>
    %cst_89 = arith.constant dense<0.000000e+00> : vector<8x128xf32>
    %401 = tpu.matmul %399, %327, %cst_89 {dimension_numbers = #tpu.dot_dimension_numbers<[1], [0], [0], [1], [0, 0, 1, 1], [], []>} : vector<8x32xf32>, vector<32x128xf32>, vector<8x128xf32> -> vector<8x128xf32>
    %402 = arith.addf %400, %401 : vector<8x128xf32>
    %403 = arith.negf %402 : vector<8x128xf32>
    %404 = math.exp %403 : vector<8x128xf32>
    %cst_90 = arith.constant 1.000000e+00 : f32
    %405 = vector.broadcast %cst_90 : f32 to vector<8x128xf32>
    %406 = arith.addf %405, %404 : vector<8x128xf32>
    %407 = arith.divf %405, %406 : vector<8x128xf32>
    %408 = math.tanh %402 : vector<8x128xf32>
    %409 = vector.extract_strided_slice %407 {offsets = [0, 32], sizes = [8, 32], strides = [1, 1]} : vector<8x128xf32> to vector<8x32xf32>
    %410 = arith.mulf %409, %396 : vector<8x32xf32>
    %411 = vector.extract_strided_slice %407 {offsets = [0, 0], sizes = [8, 32], strides = [1, 1]} : vector<8x128xf32> to vector<8x32xf32>
    %412 = vector.extract_strided_slice %408 {offsets = [0, 64], sizes = [8, 32], strides = [1, 1]} : vector<8x128xf32> to vector<8x32xf32>
    %413 = arith.mulf %411, %412 : vector<8x32xf32>
    %414 = arith.addf %410, %413 : vector<8x32xf32>
    %415 = vector.extract_strided_slice %407 {offsets = [0, 96], sizes = [8, 32], strides = [1, 1]} : vector<8x128xf32> to vector<8x32xf32>
    %416 = math.tanh %414 : vector<8x32xf32>
    %417 = arith.mulf %415, %416 : vector<8x32xf32>
    %418 = vector.extract_strided_slice %326 {offsets = [40, 0], sizes = [8, 128], strides = [1, 1]} : vector<64x128xf32> to vector<8x128xf32>
    %cst_91 = arith.constant dense<0.000000e+00> : vector<8x128xf32>
    %419 = tpu.matmul %417, %327, %cst_91 {dimension_numbers = #tpu.dot_dimension_numbers<[1], [0], [0], [1], [0, 0, 1, 1], [], []>} : vector<8x32xf32>, vector<32x128xf32>, vector<8x128xf32> -> vector<8x128xf32>
    %420 = arith.addf %418, %419 : vector<8x128xf32>
    %421 = arith.negf %420 : vector<8x128xf32>
    %422 = math.exp %421 : vector<8x128xf32>
    %cst_92 = arith.constant 1.000000e+00 : f32
    %423 = vector.broadcast %cst_92 : f32 to vector<8x128xf32>
    %424 = arith.addf %423, %422 : vector<8x128xf32>
    %425 = arith.divf %423, %424 : vector<8x128xf32>
    %426 = math.tanh %420 : vector<8x128xf32>
    %427 = vector.extract_strided_slice %425 {offsets = [0, 32], sizes = [8, 32], strides = [1, 1]} : vector<8x128xf32> to vector<8x32xf32>
    %428 = arith.mulf %427, %414 : vector<8x32xf32>
    %429 = vector.extract_strided_slice %425 {offsets = [0, 0], sizes = [8, 32], strides = [1, 1]} : vector<8x128xf32> to vector<8x32xf32>
    %430 = vector.extract_strided_slice %426 {offsets = [0, 64], sizes = [8, 32], strides = [1, 1]} : vector<8x128xf32> to vector<8x32xf32>
    %431 = arith.mulf %429, %430 : vector<8x32xf32>
    %432 = arith.addf %428, %431 : vector<8x32xf32>
    %433 = vector.extract_strided_slice %425 {offsets = [0, 96], sizes = [8, 32], strides = [1, 1]} : vector<8x128xf32> to vector<8x32xf32>
    %434 = math.tanh %432 : vector<8x32xf32>
    %435 = arith.mulf %433, %434 : vector<8x32xf32>
    %436 = vector.extract_strided_slice %326 {offsets = [48, 0], sizes = [8, 128], strides = [1, 1]} : vector<64x128xf32> to vector<8x128xf32>
    %cst_93 = arith.constant dense<0.000000e+00> : vector<8x128xf32>
    %437 = tpu.matmul %435, %327, %cst_93 {dimension_numbers = #tpu.dot_dimension_numbers<[1], [0], [0], [1], [0, 0, 1, 1], [], []>} : vector<8x32xf32>, vector<32x128xf32>, vector<8x128xf32> -> vector<8x128xf32>
    %438 = arith.addf %436, %437 : vector<8x128xf32>
    %439 = arith.negf %438 : vector<8x128xf32>
    %440 = math.exp %439 : vector<8x128xf32>
    %cst_94 = arith.constant 1.000000e+00 : f32
    %441 = vector.broadcast %cst_94 : f32 to vector<8x128xf32>
    %442 = arith.addf %441, %440 : vector<8x128xf32>
    %443 = arith.divf %441, %442 : vector<8x128xf32>
    %444 = math.tanh %438 : vector<8x128xf32>
    %445 = vector.extract_strided_slice %443 {offsets = [0, 32], sizes = [8, 32], strides = [1, 1]} : vector<8x128xf32> to vector<8x32xf32>
    %446 = arith.mulf %445, %432 : vector<8x32xf32>
    %447 = vector.extract_strided_slice %443 {offsets = [0, 0], sizes = [8, 32], strides = [1, 1]} : vector<8x128xf32> to vector<8x32xf32>
    %448 = vector.extract_strided_slice %444 {offsets = [0, 64], sizes = [8, 32], strides = [1, 1]} : vector<8x128xf32> to vector<8x32xf32>
    %449 = arith.mulf %447, %448 : vector<8x32xf32>
    %450 = arith.addf %446, %449 : vector<8x32xf32>
    %451 = vector.extract_strided_slice %443 {offsets = [0, 96], sizes = [8, 32], strides = [1, 1]} : vector<8x128xf32> to vector<8x32xf32>
    %452 = math.tanh %450 : vector<8x32xf32>
    %453 = arith.mulf %451, %452 : vector<8x32xf32>
    %454 = vector.extract_strided_slice %326 {offsets = [56, 0], sizes = [8, 128], strides = [1, 1]} : vector<64x128xf32> to vector<8x128xf32>
    %cst_95 = arith.constant dense<0.000000e+00> : vector<8x128xf32>
    %455 = tpu.matmul %453, %327, %cst_95 {dimension_numbers = #tpu.dot_dimension_numbers<[1], [0], [0], [1], [0, 0, 1, 1], [], []>} : vector<8x32xf32>, vector<32x128xf32>, vector<8x128xf32> -> vector<8x128xf32>
    %456 = arith.addf %454, %455 : vector<8x128xf32>
    %457 = arith.negf %456 : vector<8x128xf32>
    %458 = math.exp %457 : vector<8x128xf32>
    %cst_96 = arith.constant 1.000000e+00 : f32
    %459 = vector.broadcast %cst_96 : f32 to vector<8x128xf32>
    %460 = arith.addf %459, %458 : vector<8x128xf32>
    %461 = arith.divf %459, %460 : vector<8x128xf32>
    %462 = math.tanh %456 : vector<8x128xf32>
    %463 = vector.extract_strided_slice %461 {offsets = [0, 32], sizes = [8, 32], strides = [1, 1]} : vector<8x128xf32> to vector<8x32xf32>
    %464 = arith.mulf %463, %450 : vector<8x32xf32>
    %465 = vector.extract_strided_slice %461 {offsets = [0, 0], sizes = [8, 32], strides = [1, 1]} : vector<8x128xf32> to vector<8x32xf32>
    %466 = vector.extract_strided_slice %462 {offsets = [0, 64], sizes = [8, 32], strides = [1, 1]} : vector<8x128xf32> to vector<8x32xf32>
    %467 = arith.mulf %465, %466 : vector<8x32xf32>
    %468 = arith.addf %464, %467 : vector<8x32xf32>
    %469 = vector.extract_strided_slice %461 {offsets = [0, 96], sizes = [8, 32], strides = [1, 1]} : vector<8x128xf32> to vector<8x32xf32>
    %470 = math.tanh %468 : vector<8x32xf32>
    %471 = arith.mulf %469, %470 : vector<8x32xf32>
    %c0_97 = arith.constant 0 : index
    %c0_98 = arith.constant 0 : index
    %472 = vector.load %arg9[%c0_97, %c0_98] : memref<1x32xf32, #tpu.memory_space<vmem>>, vector<1x32xf32>
    %473 = vector.broadcast %472 : vector<1x32xf32> to vector<8x32xf32>
    %474 = arith.mulf %471, %473 : vector<8x32xf32>
    %cst_99 = arith.constant dense<0.000000e+00> : vector<8xf32>
    %475 = vector.multi_reduction <add>, %474, %cst_99 [1] : vector<8x32xf32> to vector<8xf32>
    %476 = vector.shape_cast %475 : vector<8xf32> to vector<8x1xf32>
    %c0_100 = arith.constant 0 : index
    %c0_101 = arith.constant 0 : index
    %477 = vector.load %arg10[%c0_100, %c0_101] : memref<1x1xf32, #tpu.memory_space<vmem>>, vector<1x1xf32>
    %478 = vector.broadcast %477 : vector<1x1xf32> to vector<8x1xf32>
    %479 = arith.addf %476, %478 : vector<8x1xf32>
    %c0_102 = arith.constant 0 : index
    %c0_103 = arith.constant 0 : index
    %480 = vector.load %arg11[%c0_102, %c0_103] : memref<8x1xf32, #tpu.memory_space<vmem>>, vector<8x1xf32>
    tpu.vector_store %arg11[%c0_102, %c0_103], %479 {strides = array<i32>} : memref<8x1xf32, #tpu.memory_space<vmem>>, vector<8x1xf32>,
    return
  }
}

</mosaic_0001>

<llo_original>
// kernel: discriminator_forward.1
$region0: #{discriminator_forward.1}
  #allocation0 [shape = 'u32[]', space=smem, size = 0x4, offset = 0x4, fixed_abs, tag = 'smem constant byte address 0x4 - core index']
  #allocation1 [shape = 'u32[72,128]{1,0:T(1,128)}', space=vmem, size = 0x9000, scoped, tag = 'internal scratch']
  #allocation2 [shape = 'f32[64,32]{1,0:T(8,128)}', space=vmem, size = 0x8000, scoped, tag = 'scratch operand']
  #allocation3 [shape = 'f32[1,1]{1,0:T(1,128)S(1)}', space=vmem, size = 0x200, scoped, tag = 'scoped memory for discriminator_forward.1']
  %s0 = inlined_call_operand.vmem [shape: s32[64,1], index: 0, kind: input, shape index: {}]
  %s1 = inlined_call_operand.vmem [shape: f32[20,128], index: 1, kind: input, shape index: {}]
  %s2 = inlined_call_operand.vmem [shape: f32[32,128], index: 2, kind: input, shape index: {}]
  %s3 = inlined_call_operand.vmem [shape: f32[32,128], index: 3, kind: input, shape index: {}]
  %s4 = inlined_call_operand.vmem [shape: f32[32,128], index: 4, kind: input, shape index: {}]
  %s5 = inlined_call_operand.vmem [shape: f32[1,128], index: 5, kind: input, shape index: {}]
  %s6 = inlined_call_operand.vmem [shape: f32[32,128], index: 6, kind: input, shape index: {}]
  %s7 = inlined_call_operand.hbm [shape: f32[32,128], index: 7, kind: input, shape index: {}]
  %s8 = inlined_call_operand.vmem [shape: f32[1,128], index: 8, kind: input, shape index: {}]
  %s9 = inlined_call_operand.vmem [shape: f32[1,32], index: 9, kind: input, shape index: {}]
  %s10 = inlined_call_operand.<no memory space> [shape: f32[1,1], index: 10, kind: input, shape index: {}]
  %s11 = inlined_call_operand.vmem [shape: f32[8,1], index: 11, kind: output, shape index: {}]
  %s12 = sld [smem:[#allocation0]]
  $region58: #{discriminator_forward.1} parent=0
    _
  %s14 = ssub.s32 1, %s12
  %s15 = scalar_select 0, %s14, %s12
  %v16 = vstv %s10
  %17 = vst [vmem:[#allocation3] sm:$0x1] %v16
  $region1: #{discriminator_forward.1} parent=0
    #allocation4 [shape = 'u8[16384]{0}', space=vmem, size = 0x4000, scoped, tag = 'input window, operand 7, single buffered']
    #allocation5 [shape = 's32[1]{0}', space=sflag, size = 0x4, scoped, tag = 'scoped memory for discriminator_forward.1']
    %18 = vsyncpa [#allocation5], 0
    // Predicated region
    $region2: #{discriminator_forward.1} parent=1 // pred_check
      _
    $region3: #{discriminator_forward.1} parent=1 // pred_check_branch
      %20 = sbr.rel (0) target = $region5
    $region4: #{discriminator_forward.1} parent=1 // pred_region
      _
    $region5: #{discriminator_forward.1} parent=1 // pred_fallthru
      _
    // Predicated region
    $region6: #{discriminator_forward.1} parent=1 // pred_check
      _
    $region7: #{discriminator_forward.1} parent=1 // pred_check_branch
      %22 = sbr.rel (0) target = $region9
    $region8: #{discriminator_forward.1} parent=1 // pred_region
      _
    $region9: #{discriminator_forward.1} parent=1 // pred_fallthru
      _
    // Predicated region
    $region10: #{discriminator_forward.1} parent=1 // pred_check
      _
    $region11: #{discriminator_forward.1} parent=1 // pred_check_branch
      %24 = sbr.rel (0) target = $region13
    $region12: #{discriminator_forward.1} parent=1 // pred_region
      _
    $region13: #{discriminator_forward.1} parent=1 // pred_fallthru
      _
    // Predicated region
    $region14: #{discriminator_forward.1} parent=1 // pred_check
      _
    $region15: #{discriminator_forward.1} parent=1 // pred_check_branch
      %26 = sbr.rel (0) target = $region17
    $region16: #{discriminator_forward.1} parent=1 // pred_region
      _
    $region17: #{discriminator_forward.1} parent=1 // pred_fallthru
      _
    // Predicated region
    $region18: #{discriminator_forward.1} parent=1 // pred_check
      _
    $region19: #{discriminator_forward.1} parent=1 // pred_check_branch
      %28 = sbr.rel (0) target = $region21
    $region20: #{discriminator_forward.1} parent=1 // pred_region
      _
    $region21: #{discriminator_forward.1} parent=1 // pred_fallthru
      _
    // Predicated region
    $region22: #{discriminator_forward.1} parent=1 // pred_check
      _
    $region23: #{discriminator_forward.1} parent=1 // pred_check_branch
      %30 = sbr.rel (0) target = $region25
    $region24: #{discriminator_forward.1} parent=1 // pred_region
      _
    $region25: #{discriminator_forward.1} parent=1 // pred_fallthru
      _
    // Predicated region
    $region26: #{discriminator_forward.1} parent=1 // pred_check
      _
    $region27: #{discriminator_forward.1} parent=1 // pred_check_branch
      %32 = sbr.rel (0) target = $region29
    $region28: #{discriminator_forward.1} parent=1 // pred_region
      _
    $region29: #{discriminator_forward.1} parent=1 // pred_fallthru
      _
    // Predicated region
    $region30: #{discriminator_forward.1} parent=1 // pred_check
      _
    $region31: #{discriminator_forward.1} parent=1 // pred_check_branch
      %34 = sbr.rel (0) target = $region33
    $region32: #{discriminator_forward.1} parent=1 // pred_region
      %36 = vsyncadd [#allocation5], 0
      %s37 = sshll.u32 %s7, 4
      %s38 = int_to_ptr.hbm [resolvable:$true] %s37
      %s39 = sshll.u32 [#allocation4], 4
      %s40 = int_to_ptr.vmem [resolvable:$true] %s39
      %45 = dma.hbm_to_vmem [thread:$0]  %s38, 512, %s40, [#allocation5], 128, 128, 8
    $region33: #{discriminator_forward.1} parent=1 // pred_fallthru
      _
    // Predicated region
    $region34: #{discriminator_forward.1} parent=1 // pred_check
      _
    $region35: #{discriminator_forward.1} parent=1 // pred_check_branch
      %47 = sbr.rel (0) target = $region37
    $region36: #{discriminator_forward.1} parent=1 // pred_region
      _
    $region37: #{discriminator_forward.1} parent=1 // pred_fallthru
      _
    // Predicated region
    $region38: #{discriminator_forward.1} parent=1 // pred_check
      _
    $region39: #{discriminator_forward.1} parent=1 // pred_check_branch
      %49 = sbr.rel (0) target = $region41
    $region40: #{discriminator_forward.1} parent=1 // pred_region
      _
    $region41: #{discriminator_forward.1} parent=1 // pred_fallthru
      _
    // Predicated region
    $region42: #{discriminator_forward.1} parent=1 // pred_check
      _
    $region43: #{discriminator_forward.1} parent=1 // pred_check_branch
      %51 = sbr.rel (0) target = $region45
    $region44: #{discriminator_forward.1} parent=1 // pred_region
      _
    $region45: #{discriminator_forward.1} parent=1 // pred_fallthru
      _
    // Predicated region
    $region46: #{discriminator_forward.1} parent=1 // pred_check
      _
    $region47: #{discriminator_forward.1} parent=1 // pred_check_branch
      %53 = sbr.rel (0) target = $region49
    $region48: #{discriminator_forward.1} parent=1 // pred_region
      %55 = dma.done [#allocation5], 512
    $region49: #{discriminator_forward.1} parent=1 // pred_fallthru
      _
    %v56 = vlaneseq
    %v57 = vand.u32 %v56, 127
    %v58 = vld [vmem:[%s0] sm:$0xff]
    %v59 = vld [vmem:[%s0 + $0x8] sm:$0xff]
    %v60 = vld [vmem:[%s0 + $0x10] sm:$0xff]
    %v61 = vld [vmem:[%s0 + $0x18] sm:$0xff]
    %v62 = vld [vmem:[%s0 + $0x20] sm:$0xff]
    %v63 = vld [vmem:[%s0 + $0x28] sm:$0xff]
    %v64 = vld [vmem:[%s0 + $0x30] sm:$0xff]
    %v65 = vld [vmem:[%s0 + $0x38] sm:$0xff]
    %66 = vset.pattern.permute.xlu0 0
    %67 = vperm.xlu0 %66, %v58
    %v68 = vpop.permute.xlu0 %67
    %69 = vset.pattern.permute.xlu0 0
    %70 = vperm.xlu0 %69, %v59
    %v71 = vpop.permute.xlu0 %70
    %72 = vset.pattern.permute.xlu0 0
    %73 = vperm.xlu0 %72, %v60
    %v74 = vpop.permute.xlu0 %73
    %75 = vset.pattern.permute.xlu0 0
    %76 = vperm.xlu0 %75, %v61
    %v77 = vpop.permute.xlu0 %76
    %78 = vset.pattern.permute.xlu0 0
    %79 = vperm.xlu0 %78, %v62
    %v80 = vpop.permute.xlu0 %79
    %81 = vset.pattern.permute.xlu0 0
    %82 = vperm.xlu0 %81, %v63
    %v83 = vpop.permute.xlu0 %82
    %84 = vset.pattern.permute.xlu0 0
    %85 = vperm.xlu0 %84, %v64
    %v86 = vpop.permute.xlu0 %85
    %87 = vset.pattern.permute.xlu0 0
    %88 = vperm.xlu0 %87, %v65
    %v89 = vpop.permute.xlu0 %88
    %vm90 = vcmp.eq.s32.totalorder %v68, %v57
    %vm91 = vcmp.eq.s32.totalorder %v71, %v57
    %vm92 = vcmp.eq.s32.totalorder %v74, %v57
    %vm93 = vcmp.eq.s32.totalorder %v77, %v57
    %vm94 = vcmp.eq.s32.totalorder %v80, %v57
    %vm95 = vcmp.eq.s32.totalorder %v83, %v57
    %vm96 = vcmp.eq.s32.totalorder %v86, %v57
    %vm97 = vcmp.eq.s32.totalorder %v89, %v57
    %v98 = vsel %vm90, 1, 0
    %v99 = vsel %vm91, 1, 0
    %v100 = vsel %vm92, 1, 0
    %v101 = vsel %vm93, 1, 0
    %v102 = vsel %vm94, 1, 0
    %v103 = vsel %vm95, 1, 0
    %v104 = vsel %vm96, 1, 0
    %v105 = vsel %vm97, 1, 0
    %v106 = vcvt.s32.f32 %v98
    %v107 = vcvt.s32.f32 %v99
    %v108 = vcvt.s32.f32 %v100
    %v109 = vcvt.s32.f32 %v101
    %v110 = vcvt.s32.f32 %v102
    %v111 = vcvt.s32.f32 %v103
    %v112 = vcvt.s32.f32 %v104
    %v113 = vcvt.s32.f32 %v105
    %v114 = vld [vmem:[%s1] sm:$0xff]
    %v115 = vld [vmem:[%s1 + $0x8] sm:$0xff]
    %v116 = vld [vmem:[%s1 + $0x10] sm:$0xf]
    %vm117 = vcmask 162816
    %v119 = vsel %vm117, %v106, 0
    %v122 = vsel %vm117, %v107, 0
    %v125 = vsel %vm117, %v108, 0
    %v128 = vsel %vm117, %v109, 0
    %v131 = vsel %vm117, %v110, 0
    %v134 = vsel %vm117, %v111, 0
    %v137 = vsel %vm117, %v112, 0
    %v140 = vsel %vm117, %v113, 0
    %vm142 = vcmask 1043456
    %v144 = vsel %vm142, %v116, 0
    %146 = vmatpush.msra.mxu0 0.0
    %147 = vmatpush.msra.mxu0 0.0
    %148 = vmatpush.msra.mxu0 0.0
    %149 = vmatpush.msra.mxu0 0.0
    %150 = vmatpush.msra.mxu0 0.0
    %151 = vmatpush.msra.mxu0 0.0
    %152 = vmatpush.msra.mxu0 0.0
    %153 = vmatpush.msra.mxu0 0.0
    %154 = vmatpush.msra.mxu0 0.0
    %155 = vmatpush.msra.mxu0 0.0
    %156 = vmatpush.msra.mxu0 0.0
    %157 = vmatpush.msra.mxu0 0.0
    %158 = vmatpush.msra.mxu0 0.0
    %159 = vmatpush.msra.mxu0 %v144
    %160 = vmatpush.msra.mxu0 %v115
    %161 = vmatpush.msra.mxu0 %v114
    %162 = vmatmul.f32.gmra.mxu0 %v119
    %v163 = vpop.f32.mrf.mxu0
    %v164 = vadd.f32 0.0, %v163
    %165 = vmatmul.f32.gmra.mxu0 %v122
    %v166 = vpop.f32.mrf.mxu0
    %v167 = vadd.f32 0.0, %v166
    %168 = vmatmul.f32.gmra.mxu0 %v125
    %v169 = vpop.f32.mrf.mxu0
    %v170 = vadd.f32 0.0, %v169
    %171 = vmatmul.f32.gmra.mxu0 %v128
    %v172 = vpop.f32.mrf.mxu0
    %v173 = vadd.f32 0.0, %v172
    %174 = vmatmul.f32.gmra.mxu0 %v131
    %v175 = vpop.f32.mrf.mxu0
    %v176 = vadd.f32 0.0, %v175
    %177 = vmatmul.f32.gmra.mxu0 %v134
    %v178 = vpop.f32.mrf.mxu0
    %v179 = vadd.f32 0.0, %v178
    %180 = vmatmul.f32.gmra.mxu0 %v137
    %v181 = vpop.f32.mrf.mxu0
    %v182 = vadd.f32 0.0, %v181
    %183 = vmatmul.f32.gmra.mxu0 %v140
    %v184 = vpop.f32.mrf.mxu0
    %v185 = vadd.f32 0.0, %v184
    %186 = vdwg.mxu0
    %v187 = vld [vmem:[%s2] sm:$0xff]
    %v188 = vld [vmem:[%s2 + $0x8] sm:$0xff]
    %v189 = vld [vmem:[%s2 + $0x10] sm:$0xff]
    %v190 = vld [vmem:[%s2 + $0x18] sm:$0xff]
    %vm191 = vcmask 261120
    %v193 = vsel %vm191, 0.0, 0
    %195 = vmatpush.msra.mxu0 0.0
    %196 = vmatpush.msra.mxu0 0.0
    %197 = vmatpush.msra.mxu0 0.0
    %198 = vmatpush.msra.mxu0 0.0
    %199 = vmatpush.msra.mxu0 0.0
    %200 = vmatpush.msra.mxu0 0.0
    %201 = vmatpush.msra.mxu0 0.0
    %202 = vmatpush.msra.mxu0 0.0
    %203 = vmatpush.msra.mxu0 0.0
    %204 = vmatpush.msra.mxu0 0.0
    %205 = vmatpush.msra.mxu0 0.0
    %206 = vmatpush.msra.mxu0 0.0
    %207 = vmatpush.msra.mxu0 %v190
    %208 = vmatpush.msra.mxu0 %v189
    %209 = vmatpush.msra.mxu0 %v188
    %210 = vmatpush.msra.mxu0 %v187
    %211 = vmatmul.f32.gmra.mxu0 %v193
    %v212 = vpop.f32.mrf.mxu0
    %v213 = vadd.f32 0.0, %v212
    %214 = vdwg.mxu0
    %v215 = vadd.f32 %v164, %v213
    %v216 = vxor.u32 %v215, 2147483648
    %v217 = vmul.f32 %v216, 1.442695
    %v218 = vpow.pop %v217
    %v219 = vadd.f32 %v218, 1.0
    %v220 = vrcp.pop %v219
    %v221 = vmul.f32 %v219, %v220
    %v222 = vsub.f32 1.0, %v221
    %v223 = vmul.f32 %v220, %v222
    %v224 = vadd.f32 %v220, %v223
    %vm225 = vweird.f32 %v219
    %vm226 = vweird.f32 %v220
    %vm227 = vmor %vm225, %vm226
    %v228 = vsel %vm227, %v220, %v224
    %v229 = vand.u32 2147483647, %v219
    %vm230 = vcmp.eq.f32.partialorder %v229, 8.507059e+37
    %v231 = vand.u32 %v219, 2147483648
    %v232 = vor.u32 1.1754944e-38, %v231
    %v233 = vsel %vm230, %v232, %v228
    %v234 = vmul.f32 1.0, %v233
    %v235 = vtanh.pop %v215
    %v236 = vmul.f32 %v234, 0.0
    %238 = vrot.lane.b32.xlu0 %v235, 64
    %v239 = vpop.permute.xlu0 %238
    %v241 = vmul.f32 %v234, %v239
    %243 = vrot.lane.b32.xlu0 %v241, 32
    %v244 = vpop.permute.xlu0 %243
    %v246 = vadd.f32 %v236, %v244
    %v247 = vtanh.pop %v246
    %249 = vrot.lane.b32.xlu0 %v247, 64
    %v250 = vpop.permute.xlu0 %249
    %v252 = vmul.f32 %v234, %v250
    %254 = vrot.lane.b32.xlu0 %v252, 32
    %v255 = vpop.permute.xlu0 %254
    %257 = vst.msk [vmem:[#allocation2] sm:$0xff] %vm191, %v255
    %v258 = vsel %vm191, %v255, 0
    %260 = vmatpush.msra.mxu0 0.0
    %261 = vmatpush.msra.mxu0 0.0
    %262 = vmatpush.msra.mxu0 0.0
    %263 = vmatpush.msra.mxu0 0.0
    %264 = vmatpush.msra.mxu0 0.0
    %265 = vmatpush.msra.mxu0 0.0
    %266 = vmatpush.msra.mxu0 0.0
    %267 = vmatpush.msra.mxu0 0.0
    %268 = vmatpush.msra.mxu0 0.0
    %269 = vmatpush.msra.mxu0 0.0
    %270 = vmatpush.msra.mxu0 0.0
    %271 = vmatpush.msra.mxu0 0.0
    %272 = vmatpush.msra.mxu0 %v190
    %273 = vmatpush.msra.mxu0 %v189
    %274 = vmatpush.msra.mxu0 %v188
    %275 = vmatpush.msra.mxu0 %v187
    %276 = vmatmul.f32.gmra.mxu0 %v258
    %v277 = vpop.f32.mrf.mxu0
    %v278 = vadd.f32 0.0, %v277
    %279 = vdwg.mxu0
    %v280 = vadd.f32 %v167, %v278
    %v281 = vxor.u32 %v280, 2147483648
    %v282 = vmul.f32 %v281, 1.442695
    %v283 = vpow.pop %v282
    %v284 = vadd.f32 %v283, 1.0
    %v285 = vrcp.pop %v284
    %v286 = vmul.f32 %v284, %v285
    %v287 = vsub.f32 1.0, %v286
    %v288 = vmul.f32 %v285, %v287
    %v289 = vadd.f32 %v285, %v288
    %vm290 = vweird.f32 %v284
    %vm291 = vweird.f32 %v285
    %vm292 = vmor %vm290, %vm291
    %v293 = vsel %vm292, %v285, %v289
    %v294 = vand.u32 2147483647, %v284
    %vm295 = vcmp.eq.f32.partialorder %v294, 8.507059e+37
    %v296 = vand.u32 %v284, 2147483648
    %v297 = vor.u32 1.1754944e-38, %v296
    %v298 = vsel %vm295, %v297, %v293
    %v299 = vmul.f32 1.0, %v298
    %v300 = vtanh.pop %v280
    %v301 = vmul.f32 %v299, %v246
    %303 = vrot.lane.b32.xlu0 %v300, 64
    %v304 = vpop.permute.xlu0 %303
    %v306 = vmul.f32 %v299, %v304
    %308 = vrot.lane.b32.xlu0 %v306, 32
    %v309 = vpop.permute.xlu0 %308
    %v311 = vadd.f32 %v301, %v309
    %v312 = vtanh.pop %v311
    %314 = vrot.lane.b32.xlu0 %v312, 64
    %v315 = vpop.permute.xlu0 %314
    %v317 = vmul.f32 %v299, %v315
    %319 = vrot.lane.b32.xlu0 %v317, 32
    %v320 = vpop.permute.xlu0 %319
    %322 = vst.msk [vmem:[#allocation2 + $0x8] sm:$0xff] %vm191, %v320
    %v323 = vsel %vm191, %v320, 0
    %325 = vmatpush.msra.mxu0 0.0
    %326 = vmatpush.msra.mxu0 0.0
    %327 = vmatpush.msra.mxu0 0.0
    %328 = vmatpush.msra.mxu0 0.0
    %329 = vmatpush.msra.mxu0 0.0
    %330 = vmatpush.msra.mxu0 0.0
    %331 = vmatpush.msra.mxu0 0.0
    %332 = vmatpush.msra.mxu0 0.0
    %333 = vmatpush.msra.mxu0 0.0
    %334 = vmatpush.msra.mxu0 0.0
    %335 = vmatpush.msra.mxu0 0.0
    %336 = vmatpush.msra.mxu0 0.0
    %337 = vmatpush.msra.mxu0 %v190
    %338 = vmatpush.msra.mxu0 %v189
    %339 = vmatpush.msra.mxu0 %v188
    %340 = vmatpush.msra.mxu0 %v187
    %341 = vmatmul.f32.gmra.mxu0 %v323
    %v342 = vpop.f32.mrf.mxu0
    %v343 = vadd.f32 0.0, %v342
    %344 = vdwg.mxu0
    %v345 = vadd.f32 %v170, %v343
    %v346 = vxor.u32 %v345, 2147483648
    %v347 = vmul.f32 %v346, 1.442695
    %v348 = vpow.pop %v347
    %v349 = vadd.f32 %v348, 1.0
    %v350 = vrcp.pop %v349
    %v351 = vmul.f32 %v349, %v350
    %v352 = vsub.f32 1.0, %v351
    %v353 = vmul.f32 %v350, %v352
    %v354 = vadd.f32 %v350, %v353
    %vm355 = vweird.f32 %v349
    %vm356 = vweird.f32 %v350
    %vm357 = vmor %vm355, %vm356
    %v358 = vsel %vm357, %v350, %v354
    %v359 = vand.u32 2147483647, %v349
    %vm360 = vcmp.eq.f32.partialorder %v359, 8.507059e+37
    %v361 = vand.u32 %v349, 2147483648
    %v362 = vor.u32 1.1754944e-38, %v361
    %v363 = vsel %vm360, %v362, %v358
    %v364 = vmul.f32 1.0, %v363
    %v365 = vtanh.pop %v345
    %v366 = vmul.f32 %v364, %v311
    %368 = vrot.lane.b32.xlu0 %v365, 64
    %v369 = vpop.permute.xlu0 %368
    %v371 = vmul.f32 %v364, %v369
    %373 = vrot.lane.b32.xlu0 %v371, 32
    %v374 = vpop.permute.xlu0 %373
    %v376 = vadd.f32 %v366, %v374
    %v377 = vtanh.pop %v376
    %379 = vrot.lane.b32.xlu0 %v377, 64
    %v380 = vpop.permute.xlu0 %379
    %v382 = vmul.f32 %v364, %v380
    %384 = vrot.lane.b32.xlu0 %v382, 32
    %v385 = vpop.permute.xlu0 %384
    %387 = vst.msk [vmem:[#allocation2 + $0x10] sm:$0xff] %vm191, %v385
    %v388 = vsel %vm191, %v385, 0
    %390 = vmatpush.msra.mxu0 0.0
    %391 = vmatpush.msra.mxu0 0.0
    %392 = vmatpush.msra.mxu0 0.0
    %393 = vmatpush.msra.mxu0 0.0
    %394 = vmatpush.msra.mxu0 0.0
    %395 = vmatpush.msra.mxu0 0.0
    %396 = vmatpush.msra.mxu0 0.0
    %397 = vmatpush.msra.mxu0 0.0
    %398 = vmatpush.msra.mxu0 0.0
    %399 = vmatpush.msra.mxu0 0.0
    %400 = vmatpush.msra.mxu0 0.0
    %401 = vmatpush.msra.mxu0 0.0
    %402 = vmatpush.msra.mxu0 %v190
    %403 = vmatpush.msra.mxu0 %v189
    %404 = vmatpush.msra.mxu0 %v188
    %405 = vmatpush.msra.mxu0 %v187
    %406 = vmatmul.f32.gmra.mxu0 %v388
    %v407 = vpop.f32.mrf.mxu0
    %v408 = vadd.f32 0.0, %v407
    %409 = vdwg.mxu0
    %v410 = vadd.f32 %v173, %v408
    %v411 = vxor.u32 %v410, 2147483648
    %v412 = vmul.f32 %v411, 1.442695
    %v413 = vpow.pop %v412
    %v414 = vadd.f32 %v413, 1.0
    %v415 = vrcp.pop %v414
    %v416 = vmul.f32 %v414, %v415
    %v417 = vsub.f32 1.0, %v416
    %v418 = vmul.f32 %v415, %v417
    %v419 = vadd.f32 %v415, %v418
    %vm420 = vweird.f32 %v414
    %vm421 = vweird.f32 %v415
    %vm422 = vmor %vm420, %vm421
    %v423 = vsel %vm422, %v415, %v419
    %v424 = vand.u32 2147483647, %v414
    %vm425 = vcmp.eq.f32.partialorder %v424, 8.507059e+37
    %v426 = vand.u32 %v414, 2147483648
    %v427 = vor.u32 1.1754944e-38, %v426
    %v428 = vsel %vm425, %v427, %v423
    %v429 = vmul.f32 1.0, %v428
    %v430 = vtanh.pop %v410
    %v431 = vmul.f32 %v429, %v376
    %433 = vrot.lane.b32.xlu0 %v430, 64
    %v434 = vpop.permute.xlu0 %433
    %v436 = vmul.f32 %v429, %v434
    %438 = vrot.lane.b32.xlu0 %v436, 32
    %v439 = vpop.permute.xlu0 %438
    %v441 = vadd.f32 %v431, %v439
    %v442 = vtanh.pop %v441
    %444 = vrot.lane.b32.xlu0 %v442, 64
    %v445 = vpop.permute.xlu0 %444
    %v447 = vmul.f32 %v429, %v445
    %449 = vrot.lane.b32.xlu0 %v447, 32
    %v450 = vpop.permute.xlu0 %449
    %452 = vst.msk [vmem:[#allocation2 + $0x18] sm:$0xff] %vm191, %v450
    %v453 = vsel %vm191, %v450, 0
    %455 = vmatpush.msra.mxu0 0.0
    %456 = vmatpush.msra.mxu0 0.0
    %457 = vmatpush.msra.mxu0 0.0
    %458 = vmatpush.msra.mxu0 0.0
    %459 = vmatpush.msra.mxu0 0.0
    %460 = vmatpush.msra.mxu0 0.0
    %461 = vmatpush.msra.mxu0 0.0
    %462 = vmatpush.msra.mxu0 0.0
    %463 = vmatpush.msra.mxu0 0.0
    %464 = vmatpush.msra.mxu0 0.0
    %465 = vmatpush.msra.mxu0 0.0
    %466 = vmatpush.msra.mxu0 0.0
    %467 = vmatpush.msra.mxu0 %v190
    %468 = vmatpush.msra.mxu0 %v189
    %469 = vmatpush.msra.mxu0 %v188
    %470 = vmatpush.msra.mxu0 %v187
    %471 = vmatmul.f32.gmra.mxu0 %v453
    %v472 = vpop.f32.mrf.mxu0
    %v473 = vadd.f32 0.0, %v472
    %474 = vdwg.mxu0
    %v475 = vadd.f32 %v176, %v473
    %v476 = vxor.u32 %v475, 2147483648
    %v477 = vmul.f32 %v476, 1.442695
    %v478 = vpow.pop %v477
    %v479 = vadd.f32 %v478, 1.0
    %v480 = vrcp.pop %v479
    %v481 = vmul.f32 %v479, %v480
    %v482 = vsub.f32 1.0, %v481
    %v483 = vmul.f32 %v480, %v482
    %v484 = vadd.f32 %v480, %v483
    %vm485 = vweird.f32 %v479
    %vm486 = vweird.f32 %v480
    %vm487 = vmor %vm485, %vm486
    %v488 = vsel %vm487, %v480, %v484
    %v489 = vand.u32 2147483647, %v479
    %vm490 = vcmp.eq.f32.partialorder %v489, 8.507059e+37
    %v491 = vand.u32 %v479, 2147483648
    %v492 = vor.u32 1.1754944e-38, %v491
    %v493 = vsel %vm490, %v492, %v488
    %v494 = vmul.f32 1.0, %v493
    %v495 = vtanh.pop %v475
    %v496 = vmul.f32 %v494, %v441
    %498 = vrot.lane.b32.xlu0 %v495, 64
    %v499 = vpop.permute.xlu0 %498
    %v501 = vmul.f32 %v494, %v499
    %503 = vrot.lane.b32.xlu0 %v501, 32
    %v504 = vpop.permute.xlu0 %503
    %v506 = vadd.f32 %v496, %v504
    %v507 = vtanh.pop %v506
    %509 = vrot.lane.b32.xlu0 %v507, 64
    %v510 = vpop.permute.xlu0 %509
    %v512 = vmul.f32 %v494, %v510
    %514 = vrot.lane.b32.xlu0 %v512, 32
    %v515 = vpop.permute.xlu0 %514
    %517 = vst.msk [vmem:[#allocation2 + $0x20] sm:$0xff] %vm191, %v515
    %v518 = vsel %vm191, %v515, 0
    %520 = vmatpush.msra.mxu0 0.0
    %521 = vmatpush.msra.mxu0 0.0
    %522 = vmatpush.msra.mxu0 0.0
    %523 = vmatpush.msra.mxu0 0.0
    %524 = vmatpush.msra.mxu0 0.0
    %525 = vmatpush.msra.mxu0 0.0
    %526 = vmatpush.msra.mxu0 0.0
    %527 = vmatpush.msra.mxu0 0.0
    %528 = vmatpush.msra.mxu0 0.0
    %529 = vmatpush.msra.mxu0 0.0
    %530 = vmatpush.msra.mxu0 0.0
    %531 = vmatpush.msra.mxu0 0.0
    %532 = vmatpush.msra.mxu0 %v190
    %533 = vmatpush.msra.mxu0 %v189
    %534 = vmatpush.msra.mxu0 %v188
    %535 = vmatpush.msra.mxu0 %v187
    %536 = vmatmul.f32.gmra.mxu0 %v518
    %v537 = vpop.f32.mrf.mxu0
    %v538 = vadd.f32 0.0, %v537
    %539 = vdwg.mxu0
    %v540 = vadd.f32 %v179, %v538
    %v541 = vxor.u32 %v540, 2147483648
    %v542 = vmul.f32 %v541, 1.442695
    %v543 = vpow.pop %v542
    %v544 = vadd.f32 %v543, 1.0
    %v545 = vrcp.pop %v544
    %v546 = vmul.f32 %v544, %v545
    %v547 = vsub.f32 1.0, %v546
    %v548 = vmul.f32 %v545, %v547
    %v549 = vadd.f32 %v545, %v548
    %vm550 = vweird.f32 %v544
    %vm551 = vweird.f32 %v545
    %vm552 = vmor %vm550, %vm551
    %v553 = vsel %vm552, %v545, %v549
    %v554 = vand.u32 2147483647, %v544
    %vm555 = vcmp.eq.f32.partialorder %v554, 8.507059e+37
    %v556 = vand.u32 %v544, 2147483648
    %v557 = vor.u32 1.1754944e-38, %v556
    %v558 = vsel %vm555, %v557, %v553
    %v559 = vmul.f32 1.0, %v558
    %v560 = vtanh.pop %v540
    %v561 = vmul.f32 %v559, %v506
    %563 = vrot.lane.b32.xlu0 %v560, 64
    %v564 = vpop.permute.xlu0 %563
    %v566 = vmul.f32 %v559, %v564
    %568 = vrot.lane.b32.xlu0 %v566, 32
    %v569 = vpop.permute.xlu0 %568
    %v571 = vadd.f32 %v561, %v569
    %v572 = vtanh.pop %v571
    %574 = vrot.lane.b32.xlu0 %v572, 64
    %v575 = vpop.permute.xlu0 %574
    %v577 = vmul.f32 %v559, %v575
    %579 = vrot.lane.b32.xlu0 %v577, 32
    %v580 = vpop.permute.xlu0 %579
    %582 = vst.msk [vmem:[#allocation2 + $0x28] sm:$0xff] %vm191, %v580
    %v583 = vsel %vm191, %v580, 0
    %585 = vmatpush.msra.mxu0 0.0
    %586 = vmatpush.msra.mxu0 0.0
    %587 = vmatpush.msra.mxu0 0.0
    %588 = vmatpush.msra.mxu0 0.0
    %589 = vmatpush.msra.mxu0 0.0
    %590 = vmatpush.msra.mxu0 0.0
    %591 = vmatpush.msra.mxu0 0.0
    %592 = vmatpush.msra.mxu0 0.0
    %593 = vmatpush.msra.mxu0 0.0
    %594 = vmatpush.msra.mxu0 0.0
    %595 = vmatpush.msra.mxu0 0.0
    %596 = vmatpush.msra.mxu0 0.0
    %597 = vmatpush.msra.mxu0 %v190
    %598 = vmatpush.msra.mxu0 %v189
    %599 = vmatpush.msra.mxu0 %v188
    %600 = vmatpush.msra.mxu0 %v187
    %601 = vmatmul.f32.gmra.mxu0 %v583
    %v602 = vpop.f32.mrf.mxu0
    %v603 = vadd.f32 0.0, %v602
    %604 = vdwg.mxu0
    %v605 = vadd.f32 %v182, %v603
    %v606 = vxor.u32 %v605, 2147483648
    %v607 = vmul.f32 %v606, 1.442695
    %v608 = vpow.pop %v607
    %v609 = vadd.f32 %v608, 1.0
    %v610 = vrcp.pop %v609
    %v611 = vmul.f32 %v609, %v610
    %v612 = vsub.f32 1.0, %v611
    %v613 = vmul.f32 %v610, %v612
    %v614 = vadd.f32 %v610, %v613
    %vm615 = vweird.f32 %v609
    %vm616 = vweird.f32 %v610
    %vm617 = vmor %vm615, %vm616
    %v618 = vsel %vm617, %v610, %v614
    %v619 = vand.u32 2147483647, %v609
    %vm620 = vcmp.eq.f32.partialorder %v619, 8.507059e+37
    %v621 = vand.u32 %v609, 2147483648
    %v622 = vor.u32 1.1754944e-38, %v621
    %v623 = vsel %vm620, %v622, %v618
    %v624 = vmul.f32 1.0, %v623
    %v625 = vtanh.pop %v605
    %v626 = vmul.f32 %v624, %v571
    %628 = vrot.lane.b32.xlu0 %v625, 64
    %v629 = vpop.permute.xlu0 %628
    %v631 = vmul.f32 %v624, %v629
    %633 = vrot.lane.b32.xlu0 %v631, 32
    %v634 = vpop.permute.xlu0 %633
    %v636 = vadd.f32 %v626, %v634
    %v637 = vtanh.pop %v636
    %639 = vrot.lane.b32.xlu0 %v637, 64
    %v640 = vpop.permute.xlu0 %639
    %v642 = vmul.f32 %v624, %v640
    %644 = vrot.lane.b32.xlu0 %v642, 32
    %v645 = vpop.permute.xlu0 %644
    %647 = vst.msk [vmem:[#allocation2 + $0x30] sm:$0xff] %vm191, %v645
    %v648 = vsel %vm191, %v645, 0
    %650 = vmatpush.msra.mxu0 0.0
    %651 = vmatpush.msra.mxu0 0.0
    %652 = vmatpush.msra.mxu0 0.0
    %653 = vmatpush.msra.mxu0 0.0
    %654 = vmatpush.msra.mxu0 0.0
    %655 = vmatpush.msra.mxu0 0.0
    %656 = vmatpush.msra.mxu0 0.0
    %657 = vmatpush.msra.mxu0 0.0
    %658 = vmatpush.msra.mxu0 0.0
    %659 = vmatpush.msra.mxu0 0.0
    %660 = vmatpush.msra.mxu0 0.0
    %661 = vmatpush.msra.mxu0 0.0
    %662 = vmatpush.msra.mxu0 %v190
    %663 = vmatpush.msra.mxu0 %v189
    %664 = vmatpush.msra.mxu0 %v188
    %665 = vmatpush.msra.mxu0 %v187
    %666 = vmatmul.f32.gmra.mxu0 %v648
    %v667 = vpop.f32.mrf.mxu0
    %v668 = vadd.f32 0.0, %v667
    %669 = vdwg.mxu0
    %v670 = vadd.f32 %v185, %v668
    %v671 = vxor.u32 %v670, 2147483648
    %v672 = vmul.f32 %v671, 1.442695
    %v673 = vpow.pop %v672
    %v674 = vadd.f32 %v673, 1.0
    %v675 = vrcp.pop %v674
    %v676 = vmul.f32 %v674, %v675
    %v677 = vsub.f32 1.0, %v676
    %v678 = vmul.f32 %v675, %v677
    %v679 = vadd.f32 %v675, %v678
    %vm680 = vweird.f32 %v674
    %vm681 = vweird.f32 %v675
    %vm682 = vmor %vm680, %vm681
    %v683 = vsel %vm682, %v675, %v679
    %v684 = vand.u32 2147483647, %v674
    %vm685 = vcmp.eq.f32.partialorder %v684, 8.507059e+37
    %v686 = vand.u32 %v674, 2147483648
    %v687 = vor.u32 1.1754944e-38, %v686
    %v688 = vsel %vm685, %v687, %v683
    %v689 = vmul.f32 1.0, %v688
    %v690 = vtanh.pop %v670
    %v691 = vmul.f32 %v689, %v636
    %693 = vrot.lane.b32.xlu0 %v690, 64
    %v694 = vpop.permute.xlu0 %693
    %v696 = vmul.f32 %v689, %v694
    %698 = vrot.lane.b32.xlu0 %v696, 32
    %v699 = vpop.permute.xlu0 %698
    %v701 = vadd.f32 %v691, %v699
    %v702 = vtanh.pop %v701
    %704 = vrot.lane.b32.xlu0 %v702, 64
    %v705 = vpop.permute.xlu0 %704
    %v707 = vmul.f32 %v689, %v705
    %709 = vrot.lane.b32.xlu0 %v707, 32
    %v710 = vpop.permute.xlu0 %709
    %712 = vst.msk [vmem:[#allocation2 + $0x38] sm:$0xff] %vm191, %v710
    %v713 = vld [vmem:[#allocation2] sm:$0xff]
    %v714 = vld [vmem:[#allocation2 + $0x8] sm:$0xff]
    %v715 = vld [vmem:[#allocation2 + $0x10] sm:$0xff]
    %v716 = vld [vmem:[#allocation2 + $0x18] sm:$0xff]
    %v717 = vld [vmem:[#allocation2 + $0x20] sm:$0xff]
    %v718 = vld [vmem:[#allocation2 + $0x28] sm:$0xff]
    %v719 = vld [vmem:[#allocation2 + $0x30] sm:$0xff]
    %v720 = vld [vmem:[#allocation2 + $0x38] sm:$0xff]
    %v721 = vld [vmem:[%s3] sm:$0xff]
    %v722 = vld [vmem:[%s3 + $0x8] sm:$0xff]
    %v723 = vld [vmem:[%s3 + $0x10] sm:$0xff]
    %v724 = vld [vmem:[%s3 + $0x18] sm:$0xff]
    %v725 = vld [vmem:[%s5] sm:$0x1]
    %v727 = vperm.slane %v725, 0
    %v730 = vsel %vm191, %v713, 0
    %v733 = vsel %vm191, %v714, 0
    %v736 = vsel %vm191, %v715, 0
    %v739 = vsel %vm191, %v716, 0
    %v742 = vsel %vm191, %v717, 0
    %v745 = vsel %vm191, %v718, 0
    %v748 = vsel %vm191, %v719, 0
    %v751 = vsel %vm191, %v720, 0
    %753 = vmatpush.msra.mxu0 0.0
    %754 = vmatpush.msra.mxu0 0.0
    %755 = vmatpush.msra.mxu0 0.0
    %756 = vmatpush.msra.mxu0 0.0
    %757 = vmatpush.msra.mxu0 0.0
    %758 = vmatpush.msra.mxu0 0.0
    %759 = vmatpush.msra.mxu0 0.0
    %760 = vmatpush.msra.mxu0 0.0
    %761 = vmatpush.msra.mxu0 0.0
    %762 = vmatpush.msra.mxu0 0.0
    %763 = vmatpush.msra.mxu0 0.0
    %764 = vmatpush.msra.mxu0 0.0
    %765 = vmatpush.msra.mxu0 %v724
    %766 = vmatpush.msra.mxu0 %v723
    %767 = vmatpush.msra.mxu0 %v722
    %768 = vmatpush.msra.mxu0 %v721
    %769 = vmatmul.f32.gmra.mxu0 %v730
    %v770 = vpop.f32.mrf.mxu0
    %v771 = vadd.f32 %v727, %v770
    %772 = vmatmul.f32.gmra.mxu0 %v733
    %v773 = vpop.f32.mrf.mxu0
    %v774 = vadd.f32 %v727, %v773
    %775 = vmatmul.f32.gmra.mxu0 %v736
    %v776 = vpop.f32.mrf.mxu0
    %v777 = vadd.f32 %v727, %v776
    %778 = vmatmul.f32.gmra.mxu0 %v739
    %v779 = vpop.f32.mrf.mxu0
    %v780 = vadd.f32 %v727, %v779
    %781 = vmatmul.f32.gmra.mxu0 %v742
    %v782 = vpop.f32.mrf.mxu0
    %v783 = vadd.f32 %v727, %v782
    %784 = vmatmul.f32.gmra.mxu0 %v745
    %v785 = vpop.f32.mrf.mxu0
    %v786 = vadd.f32 %v727, %v785
    %787 = vmatmul.f32.gmra.mxu0 %v748
    %v788 = vpop.f32.mrf.mxu0
    %v789 = vadd.f32 %v727, %v788
    %790 = vmatmul.f32.gmra.mxu0 %v751
    %v791 = vpop.f32.mrf.mxu0
    %v792 = vadd.f32 %v727, %v791
    %793 = vdwg.mxu0
    %v794 = vld [vmem:[%s4] sm:$0xff]
    %v795 = vld [vmem:[%s4 + $0x8] sm:$0xff]
    %v796 = vld [vmem:[%s4 + $0x10] sm:$0xff]
    %v797 = vld [vmem:[%s4 + $0x18] sm:$0xff]
    %798 = vmatpush.msra.mxu0 0.0
    %799 = vmatpush.msra.mxu0 0.0
    %800 = vmatpush.msra.mxu0 0.0
    %801 = vmatpush.msra.mxu0 0.0
    %802 = vmatpush.msra.mxu0 0.0
    %803 = vmatpush.msra.mxu0 0.0
    %804 = vmatpush.msra.mxu0 0.0
    %805 = vmatpush.msra.mxu0 0.0
    %806 = vmatpush.msra.mxu0 0.0
    %807 = vmatpush.msra.mxu0 0.0
    %808 = vmatpush.msra.mxu0 0.0
    %809 = vmatpush.msra.mxu0 0.0
    %810 = vmatpush.msra.mxu0 %v797
    %811 = vmatpush.msra.mxu0 %v796
    %812 = vmatpush.msra.mxu0 %v795
    %813 = vmatpush.msra.mxu0 %v794
    %814 = vmatmul.f32.gmra.mxu0 %v193
    %v815 = vpop.f32.mrf.mxu0
    %v816 = vadd.f32 0.0, %v815
    %817 = vdwg.mxu0
    %v818 = vadd.f32 %v771, %v816
    %v819 = vxor.u32 %v818, 2147483648
    %v820 = vmul.f32 %v819, 1.442695
    %v821 = vpow.pop %v820
    %v822 = vadd.f32 %v821, 1.0
    %v823 = vrcp.pop %v822
    %v824 = vmul.f32 %v822, %v823
    %v825 = vsub.f32 1.0, %v824
    %v826 = vmul.f32 %v823, %v825
    %v827 = vadd.f32 %v823, %v826
    %vm828 = vweird.f32 %v822
    %vm829 = vweird.f32 %v823
    %vm830 = vmor %vm828, %vm829
    %v831 = vsel %vm830, %v823, %v827
    %v832 = vand.u32 2147483647, %v822
    %vm833 = vcmp.eq.f32.partialorder %v832, 8.507059e+37
    %v834 = vand.u32 %v822, 2147483648
    %v835 = vor.u32 1.1754944e-38, %v834
    %v836 = vsel %vm833, %v835, %v831
    %v837 = vmul.f32 1.0, %v836
    %v838 = vtanh.pop %v818
    %v839 = vmul.f32 %v837, 0.0
    %841 = vrot.lane.b32.xlu0 %v838, 64
    %v842 = vpop.permute.xlu0 %841
    %v844 = vmul.f32 %v837, %v842
    %846 = vrot.lane.b32.xlu0 %v844, 32
    %v847 = vpop.permute.xlu0 %846
    %v849 = vadd.f32 %v839, %v847
    %v850 = vtanh.pop %v849
    %852 = vrot.lane.b32.xlu0 %v850, 64
    %v853 = vpop.permute.xlu0 %852
    %v855 = vmul.f32 %v837, %v853
    %857 = vrot.lane.b32.xlu0 %v855, 32
    %v858 = vpop.permute.xlu0 %857
    %860 = vst.msk [vmem:[#allocation2] sm:$0xff] %vm191, %v858
    %v861 = vsel %vm191, %v858, 0
    %863 = vmatpush.msra.mxu0 0.0
    %864 = vmatpush.msra.mxu0 0.0
    %865 = vmatpush.msra.mxu0 0.0
    %866 = vmatpush.msra.mxu0 0.0
    %867 = vmatpush.msra.mxu0 0.0
    %868 = vmatpush.msra.mxu0 0.0
    %869 = vmatpush.msra.mxu0 0.0
    %870 = vmatpush.msra.mxu0 0.0
    %871 = vmatpush.msra.mxu0 0.0
    %872 = vmatpush.msra.mxu0 0.0
    %873 = vmatpush.msra.mxu0 0.0
    %874 = vmatpush.msra.mxu0 0.0
    %875 = vmatpush.msra.mxu0 %v797
    %876 = vmatpush.msra.mxu0 %v796
    %877 = vmatpush.msra.mxu0 %v795
    %878 = vmatpush.msra.mxu0 %v794
    %879 = vmatmul.f32.gmra.mxu0 %v861
    %v880 = vpop.f32.mrf.mxu0
    %v881 = vadd.f32 0.0, %v880
    %882 = vdwg.mxu0
    %v883 = vadd.f32 %v774, %v881
    %v884 = vxor.u32 %v883, 2147483648
    %v885 = vmul.f32 %v884, 1.442695
    %v886 = vpow.pop %v885
    %v887 = vadd.f32 %v886, 1.0
    %v888 = vrcp.pop %v887
    %v889 = vmul.f32 %v887, %v888
    %v890 = vsub.f32 1.0, %v889
    %v891 = vmul.f32 %v888, %v890
    %v892 = vadd.f32 %v888, %v891
    %vm893 = vweird.f32 %v887
    %vm894 = vweird.f32 %v888
    %vm895 = vmor %vm893, %vm894
    %v896 = vsel %vm895, %v888, %v892
    %v897 = vand.u32 2147483647, %v887
    %vm898 = vcmp.eq.f32.partialorder %v897, 8.507059e+37
    %v899 = vand.u32 %v887, 2147483648
    %v900 = vor.u32 1.1754944e-38, %v899
    %v901 = vsel %vm898, %v900, %v896
    %v902 = vmul.f32 1.0, %v901
    %v903 = vtanh.pop %v883
    %v904 = vmul.f32 %v902, %v849
    %906 = vrot.lane.b32.xlu0 %v903, 64
    %v907 = vpop.permute.xlu0 %906
    %v909 = vmul.f32 %v902, %v907
    %911 = vrot.lane.b32.xlu0 %v909, 32
    %v912 = vpop.permute.xlu0 %911
    %v914 = vadd.f32 %v904, %v912
    %v915 = vtanh.pop %v914
    %917 = vrot.lane.b32.xlu0 %v915, 64
    %v918 = vpop.permute.xlu0 %917
    %v920 = vmul.f32 %v902, %v918
    %922 = vrot.lane.b32.xlu0 %v920, 32
    %v923 = vpop.permute.xlu0 %922
    %925 = vst.msk [vmem:[#allocation2 + $0x8] sm:$0xff] %vm191, %v923
    %v926 = vsel %vm191, %v923, 0
    %928 = vmatpush.msra.mxu0 0.0
    %929 = vmatpush.msra.mxu0 0.0
    %930 = vmatpush.msra.mxu0 0.0
    %931 = vmatpush.msra.mxu0 0.0
    %932 = vmatpush.msra.mxu0 0.0
    %933 = vmatpush.msra.mxu0 0.0
    %934 = vmatpush.msra.mxu0 0.0
    %935 = vmatpush.msra.mxu0 0.0
    %936 = vmatpush.msra.mxu0 0.0
    %937 = vmatpush.msra.mxu0 0.0
    %938 = vmatpush.msra.mxu0 0.0
    %939 = vmatpush.msra.mxu0 0.0
    %940 = vmatpush.msra.mxu0 %v797
    %941 = vmatpush.msra.mxu0 %v796
    %942 = vmatpush.msra.mxu0 %v795
    %943 = vmatpush.msra.mxu0 %v794
    %944 = vmatmul.f32.gmra.mxu0 %v926
    %v945 = vpop.f32.mrf.mxu0
    %v946 = vadd.f32 0.0, %v945
    %947 = vdwg.mxu0
    %v948 = vadd.f32 %v777, %v946
    %v949 = vxor.u32 %v948, 2147483648
    %v950 = vmul.f32 %v949, 1.442695
    %v951 = vpow.pop %v950
    %v952 = vadd.f32 %v951, 1.0
    %v953 = vrcp.pop %v952
    %v954 = vmul.f32 %v952, %v953
    %v955 = vsub.f32 1.0, %v954
    %v956 = vmul.f32 %v953, %v955
    %v957 = vadd.f32 %v953, %v956
    %vm958 = vweird.f32 %v952
    %vm959 = vweird.f32 %v953
    %vm960 = vmor %vm958, %vm959
    %v961 = vsel %vm960, %v953, %v957
    %v962 = vand.u32 2147483647, %v952
    %vm963 = vcmp.eq.f32.partialorder %v962, 8.507059e+37
    %v964 = vand.u32 %v952, 2147483648
    %v965 = vor.u32 1.1754944e-38, %v964
    %v966 = vsel %vm963, %v965, %v961
    %v967 = vmul.f32 1.0, %v966
    %v968 = vtanh.pop %v948
    %v969 = vmul.f32 %v967, %v914
    %971 = vrot.lane.b32.xlu0 %v968, 64
    %v972 = vpop.permute.xlu0 %971
    %v974 = vmul.f32 %v967, %v972
    %976 = vrot.lane.b32.xlu0 %v974, 32
    %v977 = vpop.permute.xlu0 %976
    %v979 = vadd.f32 %v969, %v977
    %v980 = vtanh.pop %v979
    %982 = vrot.lane.b32.xlu0 %v980, 64
    %v983 = vpop.permute.xlu0 %982
    %v985 = vmul.f32 %v967, %v983
    %987 = vrot.lane.b32.xlu0 %v985, 32
    %v988 = vpop.permute.xlu0 %987
    %990 = vst.msk [vmem:[#allocation2 + $0x10] sm:$0xff] %vm191, %v988
    %v991 = vsel %vm191, %v988, 0
    %993 = vmatpush.msra.mxu0 0.0
    %994 = vmatpush.msra.mxu0 0.0
    %995 = vmatpush.msra.mxu0 0.0
    %996 = vmatpush.msra.mxu0 0.0
    %997 = vmatpush.msra.mxu0 0.0
    %998 = vmatpush.msra.mxu0 0.0
    %999 = vmatpush.msra.mxu0 0.0
    %1000 = vmatpush.msra.mxu0 0.0
    %1001 = vmatpush.msra.mxu0 0.0
    %1002 = vmatpush.msra.mxu0 0.0
    %1003 = vmatpush.msra.mxu0 0.0
    %1004 = vmatpush.msra.mxu0 0.0
    %1005 = vmatpush.msra.mxu0 %v797
    %1006 = vmatpush.msra.mxu0 %v796
    %1007 = vmatpush.msra.mxu0 %v795
    %1008 = vmatpush.msra.mxu0 %v794
    %1009 = vmatmul.f32.gmra.mxu0 %v991
    %v1010 = vpop.f32.mrf.mxu0
    %v1011 = vadd.f32 0.0, %v1010
    %1012 = vdwg.mxu0
    %v1013 = vadd.f32 %v780, %v1011
    %v1014 = vxor.u32 %v1013, 2147483648
    %v1015 = vmul.f32 %v1014, 1.442695
    %v1016 = vpow.pop %v1015
    %v1017 = vadd.f32 %v1016, 1.0
    %v1018 = vrcp.pop %v1017
    %v1019 = vmul.f32 %v1017, %v1018
    %v1020 = vsub.f32 1.0, %v1019
    %v1021 = vmul.f32 %v1018, %v1020
    %v1022 = vadd.f32 %v1018, %v1021
    %vm1023 = vweird.f32 %v1017
    %vm1024 = vweird.f32 %v1018
    %vm1025 = vmor %vm1023, %vm1024
    %v1026 = vsel %vm1025, %v1018, %v1022
    %v1027 = vand.u32 2147483647, %v1017
    %vm1028 = vcmp.eq.f32.partialorder %v1027, 8.507059e+37
    %v1029 = vand.u32 %v1017, 2147483648
    %v1030 = vor.u32 1.1754944e-38, %v1029
    %v1031 = vsel %vm1028, %v1030, %v1026
    %v1032 = vmul.f32 1.0, %v1031
    %v1033 = vtanh.pop %v1013
    %v1034 = vmul.f32 %v1032, %v979
    %1036 = vrot.lane.b32.xlu0 %v1033, 64
    %v1037 = vpop.permute.xlu0 %1036
    %v1039 = vmul.f32 %v1032, %v1037
    %1041 = vrot.lane.b32.xlu0 %v1039, 32
    %v1042 = vpop.permute.xlu0 %1041
    %v1044 = vadd.f32 %v1034, %v1042
    %v1045 = vtanh.pop %v1044
    %1047 = vrot.lane.b32.xlu0 %v1045, 64
    %v1048 = vpop.permute.xlu0 %1047
    %v1050 = vmul.f32 %v1032, %v1048
    %1052 = vrot.lane.b32.xlu0 %v1050, 32
    %v1053 = vpop.permute.xlu0 %1052
    %1055 = vst.msk [vmem:[#allocation2 + $0x18] sm:$0xff] %vm191, %v1053
    %v1056 = vsel %vm191, %v1053, 0
    %1058 = vmatpush.msra.mxu0 0.0
    %1059 = vmatpush.msra.mxu0 0.0
    %1060 = vmatpush.msra.mxu0 0.0
    %1061 = vmatpush.msra.mxu0 0.0
    %1062 = vmatpush.msra.mxu0 0.0
    %1063 = vmatpush.msra.mxu0 0.0
    %1064 = vmatpush.msra.mxu0 0.0
    %1065 = vmatpush.msra.mxu0 0.0
    %1066 = vmatpush.msra.mxu0 0.0
    %1067 = vmatpush.msra.mxu0 0.0
    %1068 = vmatpush.msra.mxu0 0.0
    %1069 = vmatpush.msra.mxu0 0.0
    %1070 = vmatpush.msra.mxu0 %v797
    %1071 = vmatpush.msra.mxu0 %v796
    %1072 = vmatpush.msra.mxu0 %v795
    %1073 = vmatpush.msra.mxu0 %v794
    %1074 = vmatmul.f32.gmra.mxu0 %v1056
    %v1075 = vpop.f32.mrf.mxu0
    %v1076 = vadd.f32 0.0, %v1075
    %1077 = vdwg.mxu0
    %v1078 = vadd.f32 %v783, %v1076
    %v1079 = vxor.u32 %v1078, 2147483648
    %v1080 = vmul.f32 %v1079, 1.442695
    %v1081 = vpow.pop %v1080
    %v1082 = vadd.f32 %v1081, 1.0
    %v1083 = vrcp.pop %v1082
    %v1084 = vmul.f32 %v1082, %v1083
    %v1085 = vsub.f32 1.0, %v1084
    %v1086 = vmul.f32 %v1083, %v1085
    %v1087 = vadd.f32 %v1083, %v1086
    %vm1088 = vweird.f32 %v1082
    %vm1089 = vweird.f32 %v1083
    %vm1090 = vmor %vm1088, %vm1089
    %v1091 = vsel %vm1090, %v1083, %v1087
    %v1092 = vand.u32 2147483647, %v1082
    %vm1093 = vcmp.eq.f32.partialorder %v1092, 8.507059e+37
    %v1094 = vand.u32 %v1082, 2147483648
    %v1095 = vor.u32 1.1754944e-38, %v1094
    %v1096 = vsel %vm1093, %v1095, %v1091
    %v1097 = vmul.f32 1.0, %v1096
    %v1098 = vtanh.pop %v1078
    %v1099 = vmul.f32 %v1097, %v1044
    %1101 = vrot.lane.b32.xlu0 %v1098, 64
    %v1102 = vpop.permute.xlu0 %1101
    %v1104 = vmul.f32 %v1097, %v1102
    %1106 = vrot.lane.b32.xlu0 %v1104, 32
    %v1107 = vpop.permute.xlu0 %1106
    %v1109 = vadd.f32 %v1099, %v1107
    %v1110 = vtanh.pop %v1109
    %1112 = vrot.lane.b32.xlu0 %v1110, 64
    %v1113 = vpop.permute.xlu0 %1112
    %v1115 = vmul.f32 %v1097, %v1113
    %1117 = vrot.lane.b32.xlu0 %v1115, 32
    %v1118 = vpop.permute.xlu0 %1117
    %1120 = vst.msk [vmem:[#allocation2 + $0x20] sm:$0xff] %vm191, %v1118
    %v1121 = vsel %vm191, %v1118, 0
    %1123 = vmatpush.msra.mxu0 0.0
    %1124 = vmatpush.msra.mxu0 0.0
    %1125 = vmatpush.msra.mxu0 0.0
    %1126 = vmatpush.msra.mxu0 0.0
    %1127 = vmatpush.msra.mxu0 0.0
    %1128 = vmatpush.msra.mxu0 0.0
    %1129 = vmatpush.msra.mxu0 0.0
    %1130 = vmatpush.msra.mxu0 0.0
    %1131 = vmatpush.msra.mxu0 0.0
    %1132 = vmatpush.msra.mxu0 0.0
    %1133 = vmatpush.msra.mxu0 0.0
    %1134 = vmatpush.msra.mxu0 0.0
    %1135 = vmatpush.msra.mxu0 %v797
    %1136 = vmatpush.msra.mxu0 %v796
    %1137 = vmatpush.msra.mxu0 %v795
    %1138 = vmatpush.msra.mxu0 %v794
    %1139 = vmatmul.f32.gmra.mxu0 %v1121
    %v1140 = vpop.f32.mrf.mxu0
    %v1141 = vadd.f32 0.0, %v1140
    %1142 = vdwg.mxu0
    %v1143 = vadd.f32 %v786, %v1141
    %v1144 = vxor.u32 %v1143, 2147483648
    %v1145 = vmul.f32 %v1144, 1.442695
    %v1146 = vpow.pop %v1145
    %v1147 = vadd.f32 %v1146, 1.0
    %v1148 = vrcp.pop %v1147
    %v1149 = vmul.f32 %v1147, %v1148
    %v1150 = vsub.f32 1.0, %v1149
    %v1151 = vmul.f32 %v1148, %v1150
    %v1152 = vadd.f32 %v1148, %v1151
    %vm1153 = vweird.f32 %v1147
    %vm1154 = vweird.f32 %v1148
    %vm1155 = vmor %vm1153, %vm1154
    %v1156 = vsel %vm1155, %v1148, %v1152
    %v1157 = vand.u32 2147483647, %v1147
    %vm1158 = vcmp.eq.f32.partialorder %v1157, 8.507059e+37
    %v1159 = vand.u32 %v1147, 2147483648
    %v1160 = vor.u32 1.1754944e-38, %v1159
    %v1161 = vsel %vm1158, %v1160, %v1156
    %v1162 = vmul.f32 1.0, %v1161
    %v1163 = vtanh.pop %v1143
    %v1164 = vmul.f32 %v1162, %v1109
    %1166 = vrot.lane.b32.xlu0 %v1163, 64
    %v1167 = vpop.permute.xlu0 %1166
    %v1169 = vmul.f32 %v1162, %v1167
    %1171 = vrot.lane.b32.xlu0 %v1169, 32
    %v1172 = vpop.permute.xlu0 %1171
    %v1174 = vadd.f32 %v1164, %v1172
    %v1175 = vtanh.pop %v1174
    %1177 = vrot.lane.b32.xlu0 %v1175, 64
    %v1178 = vpop.permute.xlu0 %1177
    %v1180 = vmul.f32 %v1162, %v1178
    %1182 = vrot.lane.b32.xlu0 %v1180, 32
    %v1183 = vpop.permute.xlu0 %1182
    %1185 = vst.msk [vmem:[#allocation2 + $0x28] sm:$0xff] %vm191, %v1183
    %v1186 = vsel %vm191, %v1183, 0
    %1188 = vmatpush.msra.mxu0 0.0
    %1189 = vmatpush.msra.mxu0 0.0
    %1190 = vmatpush.msra.mxu0 0.0
    %1191 = vmatpush.msra.mxu0 0.0
    %1192 = vmatpush.msra.mxu0 0.0
    %1193 = vmatpush.msra.mxu0 0.0
    %1194 = vmatpush.msra.mxu0 0.0
    %1195 = vmatpush.msra.mxu0 0.0
    %1196 = vmatpush.msra.mxu0 0.0
    %1197 = vmatpush.msra.mxu0 0.0
    %1198 = vmatpush.msra.mxu0 0.0
    %1199 = vmatpush.msra.mxu0 0.0
    %1200 = vmatpush.msra.mxu0 %v797
    %1201 = vmatpush.msra.mxu0 %v796
    %1202 = vmatpush.msra.mxu0 %v795
    %1203 = vmatpush.msra.mxu0 %v794
    %1204 = vmatmul.f32.gmra.mxu0 %v1186
    %v1205 = vpop.f32.mrf.mxu0
    %v1206 = vadd.f32 0.0, %v1205
    %1207 = vdwg.mxu0
    %v1208 = vadd.f32 %v789, %v1206
    %v1209 = vxor.u32 %v1208, 2147483648
    %v1210 = vmul.f32 %v1209, 1.442695
    %v1211 = vpow.pop %v1210
    %v1212 = vadd.f32 %v1211, 1.0
    %v1213 = vrcp.pop %v1212
    %v1214 = vmul.f32 %v1212, %v1213
    %v1215 = vsub.f32 1.0, %v1214
    %v1216 = vmul.f32 %v1213, %v1215
    %v1217 = vadd.f32 %v1213, %v1216
    %vm1218 = vweird.f32 %v1212
    %vm1219 = vweird.f32 %v1213
    %vm1220 = vmor %vm1218, %vm1219
    %v1221 = vsel %vm1220, %v1213, %v1217
    %v1222 = vand.u32 2147483647, %v1212
    %vm1223 = vcmp.eq.f32.partialorder %v1222, 8.507059e+37
    %v1224 = vand.u32 %v1212, 2147483648
    %v1225 = vor.u32 1.1754944e-38, %v1224
    %v1226 = vsel %vm1223, %v1225, %v1221
    %v1227 = vmul.f32 1.0, %v1226
    %v1228 = vtanh.pop %v1208
    %v1229 = vmul.f32 %v1227, %v1174
    %1231 = vrot.lane.b32.xlu0 %v1228, 64
    %v1232 = vpop.permute.xlu0 %1231
    %v1234 = vmul.f32 %v1227, %v1232
    %1236 = vrot.lane.b32.xlu0 %v1234, 32
    %v1237 = vpop.permute.xlu0 %1236
    %v1239 = vadd.f32 %v1229, %v1237
    %v1240 = vtanh.pop %v1239
    %1242 = vrot.lane.b32.xlu0 %v1240, 64
    %v1243 = vpop.permute.xlu0 %1242
    %v1245 = vmul.f32 %v1227, %v1243
    %1247 = vrot.lane.b32.xlu0 %v1245, 32
    %v1248 = vpop.permute.xlu0 %1247
    %1250 = vst.msk [vmem:[#allocation2 + $0x30] sm:$0xff] %vm191, %v1248
    %v1251 = vsel %vm191, %v1248, 0
    %1253 = vmatpush.msra.mxu0 0.0
    %1254 = vmatpush.msra.mxu0 0.0
    %1255 = vmatpush.msra.mxu0 0.0
    %1256 = vmatpush.msra.mxu0 0.0
    %1257 = vmatpush.msra.mxu0 0.0
    %1258 = vmatpush.msra.mxu0 0.0
    %1259 = vmatpush.msra.mxu0 0.0
    %1260 = vmatpush.msra.mxu0 0.0
    %1261 = vmatpush.msra.mxu0 0.0
    %1262 = vmatpush.msra.mxu0 0.0
    %1263 = vmatpush.msra.mxu0 0.0
    %1264 = vmatpush.msra.mxu0 0.0
    %1265 = vmatpush.msra.mxu0 %v797
    %1266 = vmatpush.msra.mxu0 %v796
    %1267 = vmatpush.msra.mxu0 %v795
    %1268 = vmatpush.msra.mxu0 %v794
    %1269 = vmatmul.f32.gmra.mxu0 %v1251
    %v1270 = vpop.f32.mrf.mxu0
    %v1271 = vadd.f32 0.0, %v1270
    %1272 = vdwg.mxu0
    %v1273 = vadd.f32 %v792, %v1271
    %v1274 = vxor.u32 %v1273, 2147483648
    %v1275 = vmul.f32 %v1274, 1.442695
    %v1276 = vpow.pop %v1275
    %v1277 = vadd.f32 %v1276, 1.0
    %v1278 = vrcp.pop %v1277
    %v1279 = vmul.f32 %v1277, %v1278
    %v1280 = vsub.f32 1.0, %v1279
    %v1281 = vmul.f32 %v1278, %v1280
    %v1282 = vadd.f32 %v1278, %v1281
    %vm1283 = vweird.f32 %v1277
    %vm1284 = vweird.f32 %v1278
    %vm1285 = vmor %vm1283, %vm1284
    %v1286 = vsel %vm1285, %v1278, %v1282
    %v1287 = vand.u32 2147483647, %v1277
    %vm1288 = vcmp.eq.f32.partialorder %v1287, 8.507059e+37
    %v1289 = vand.u32 %v1277, 2147483648
    %v1290 = vor.u32 1.1754944e-38, %v1289
    %v1291 = vsel %vm1288, %v1290, %v1286
    %v1292 = vmul.f32 1.0, %v1291
    %v1293 = vtanh.pop %v1273
    %v1294 = vmul.f32 %v1292, %v1239
    %1296 = vrot.lane.b32.xlu0 %v1293, 64
    %v1297 = vpop.permute.xlu0 %1296
    %v1299 = vmul.f32 %v1292, %v1297
    %1301 = vrot.lane.b32.xlu0 %v1299, 32
    %v1302 = vpop.permute.xlu0 %1301
    %v1304 = vadd.f32 %v1294, %v1302
    %v1305 = vtanh.pop %v1304
    %1307 = vrot.lane.b32.xlu0 %v1305, 64
    %v1308 = vpop.permute.xlu0 %1307
    %v1310 = vmul.f32 %v1292, %v1308
    %1312 = vrot.lane.b32.xlu0 %v1310, 32
    %v1313 = vpop.permute.xlu0 %1312
    %1315 = vst.msk [vmem:[#allocation2 + $0x38] sm:$0xff] %vm191, %v1313
    %v1316 = vld [vmem:[#allocation2] sm:$0xff]
    %v1317 = vld [vmem:[#allocation2 + $0x8] sm:$0xff]
    %v1318 = vld [vmem:[#allocation2 + $0x10] sm:$0xff]
    %v1319 = vld [vmem:[#allocation2 + $0x18] sm:$0xff]
    %v1320 = vld [vmem:[#allocation2 + $0x20] sm:$0xff]
    %v1321 = vld [vmem:[#allocation2 + $0x28] sm:$0xff]
    %v1322 = vld [vmem:[#allocation2 + $0x30] sm:$0xff]
    %v1323 = vld [vmem:[#allocation2 + $0x38] sm:$0xff]
    %v1324 = vld [vmem:[%s6] sm:$0xff]
    %v1325 = vld [vmem:[%s6 + $0x8] sm:$0xff]
    %v1326 = vld [vmem:[%s6 + $0x10] sm:$0xff]
    %v1327 = vld [vmem:[%s6 + $0x18] sm:$0xff]
    %v1328 = vld [vmem:[%s8] sm:$0x1]
    %v1330 = vperm.slane %v1328, 0
    %v1333 = vsel %vm191, %v1316, 0
    %v1336 = vsel %vm191, %v1317, 0
    %v1339 = vsel %vm191, %v1318, 0
    %v1342 = vsel %vm191, %v1319, 0
    %v1345 = vsel %vm191, %v1320, 0
    %v1348 = vsel %vm191, %v1321, 0
    %v1351 = vsel %vm191, %v1322, 0
    %v1354 = vsel %vm191, %v1323, 0
    %1356 = vmatpush.msra.mxu0 0.0
    %1357 = vmatpush.msra.mxu0 0.0
    %1358 = vmatpush.msra.mxu0 0.0
    %1359 = vmatpush.msra.mxu0 0.0
    %1360 = vmatpush.msra.mxu0 0.0
    %1361 = vmatpush.msra.mxu0 0.0
    %1362 = vmatpush.msra.mxu0 0.0
    %1363 = vmatpush.msra.mxu0 0.0
    %1364 = vmatpush.msra.mxu0 0.0
    %1365 = vmatpush.msra.mxu0 0.0
    %1366 = vmatpush.msra.mxu0 0.0
    %1367 = vmatpush.msra.mxu0 0.0
    %1368 = vmatpush.msra.mxu0 %v1327
    %1369 = vmatpush.msra.mxu0 %v1326
    %1370 = vmatpush.msra.mxu0 %v1325
    %1371 = vmatpush.msra.mxu0 %v1324
    %1372 = vmatmul.f32.gmra.mxu0 %v1333
    %v1373 = vpop.f32.mrf.mxu0
    %v1374 = vadd.f32 %v1330, %v1373
    %1375 = vmatmul.f32.gmra.mxu0 %v1336
    %v1376 = vpop.f32.mrf.mxu0
    %v1377 = vadd.f32 %v1330, %v1376
    %1378 = vmatmul.f32.gmra.mxu0 %v1339
    %v1379 = vpop.f32.mrf.mxu0
    %v1380 = vadd.f32 %v1330, %v1379
    %1381 = vmatmul.f32.gmra.mxu0 %v1342
    %v1382 = vpop.f32.mrf.mxu0
    %v1383 = vadd.f32 %v1330, %v1382
    %1384 = vmatmul.f32.gmra.mxu0 %v1345
    %v1385 = vpop.f32.mrf.mxu0
    %v1386 = vadd.f32 %v1330, %v1385
    %1387 = vmatmul.f32.gmra.mxu0 %v1348
    %v1388 = vpop.f32.mrf.mxu0
    %v1389 = vadd.f32 %v1330, %v1388
    %1390 = vmatmul.f32.gmra.mxu0 %v1351
    %v1391 = vpop.f32.mrf.mxu0
    %v1392 = vadd.f32 %v1330, %v1391
    %1393 = vmatmul.f32.gmra.mxu0 %v1354
    %v1394 = vpop.f32.mrf.mxu0
    %v1395 = vadd.f32 %v1330, %v1394
    %1396 = vdwg.mxu0
    %v1397 = vld [vmem:[#allocation4] sm:$0xff]
    %v1398 = vld [vmem:[#allocation4 + $0x8] sm:$0xff]
    %v1399 = vld [vmem:[#allocation4 + $0x10] sm:$0xff]
    %v1400 = vld [vmem:[#allocation4 + $0x18] sm:$0xff]
    %1401 = vmatpush.msra.mxu0 0.0
    %1402 = vmatpush.msra.mxu0 0.0
    %1403 = vmatpush.msra.mxu0 0.0
    %1404 = vmatpush.msra.mxu0 0.0
    %1405 = vmatpush.msra.mxu0 0.0
    %1406 = vmatpush.msra.mxu0 0.0
    %1407 = vmatpush.msra.mxu0 0.0
    %1408 = vmatpush.msra.mxu0 0.0
    %1409 = vmatpush.msra.mxu0 0.0
    %1410 = vmatpush.msra.mxu0 0.0
    %1411 = vmatpush.msra.mxu0 0.0
    %1412 = vmatpush.msra.mxu0 0.0
    %1413 = vmatpush.msra.mxu0 %v1400
    %1414 = vmatpush.msra.mxu0 %v1399
    %1415 = vmatpush.msra.mxu0 %v1398
    %1416 = vmatpush.msra.mxu0 %v1397
    %1417 = vmatmul.f32.gmra.mxu0 %v193
    %v1418 = vpop.f32.mrf.mxu0
    %v1419 = vadd.f32 0.0, %v1418
    %1420 = vdwg.mxu0
    %v1421 = vadd.f32 %v1374, %v1419
    %v1422 = vxor.u32 %v1421, 2147483648
    %v1423 = vmul.f32 %v1422, 1.442695
    %v1424 = vpow.pop %v1423
    %v1425 = vadd.f32 %v1424, 1.0
    %v1426 = vrcp.pop %v1425
    %v1427 = vmul.f32 %v1425, %v1426
    %v1428 = vsub.f32 1.0, %v1427
    %v1429 = vmul.f32 %v1426, %v1428
    %v1430 = vadd.f32 %v1426, %v1429
    %vm1431 = vweird.f32 %v1425
    %vm1432 = vweird.f32 %v1426
    %vm1433 = vmor %vm1431, %vm1432
    %v1434 = vsel %vm1433, %v1426, %v1430
    %v1435 = vand.u32 2147483647, %v1425
    %vm1436 = vcmp.eq.f32.partialorder %v1435, 8.507059e+37
    %v1437 = vand.u32 %v1425, 2147483648
    %v1438 = vor.u32 1.1754944e-38, %v1437
    %v1439 = vsel %vm1436, %v1438, %v1434
    %v1440 = vmul.f32 1.0, %v1439
    %v1441 = vtanh.pop %v1421
    %v1442 = vmul.f32 %v1440, 0.0
    %1444 = vrot.lane.b32.xlu0 %v1441, 64
    %v1445 = vpop.permute.xlu0 %1444
    %v1447 = vmul.f32 %v1440, %v1445
    %1449 = vrot.lane.b32.xlu0 %v1447, 32
    %v1450 = vpop.permute.xlu0 %1449
    %v1452 = vadd.f32 %v1442, %v1450
    %v1453 = vtanh.pop %v1452
    %1455 = vrot.lane.b32.xlu0 %v1453, 64
    %v1456 = vpop.permute.xlu0 %1455
    %v1458 = vmul.f32 %v1440, %v1456
    %1460 = vrot.lane.b32.xlu0 %v1458, 32
    %v1461 = vpop.permute.xlu0 %1460
    %v1462 = vsel %vm191, %v1461, 0
    %1464 = vmatpush.msra.mxu0 0.0
    %1465 = vmatpush.msra.mxu0 0.0
    %1466 = vmatpush.msra.mxu0 0.0
    %1467 = vmatpush.msra.mxu0 0.0
    %1468 = vmatpush.msra.mxu0 0.0
    %1469 = vmatpush.msra.mxu0 0.0
    %1470 = vmatpush.msra.mxu0 0.0
    %1471 = vmatpush.msra.mxu0 0.0
    %1472 = vmatpush.msra.mxu0 0.0
    %1473 = vmatpush.msra.mxu0 0.0
    %1474 = vmatpush.msra.mxu0 0.0
    %1475 = vmatpush.msra.mxu0 0.0
    %1476 = vmatpush.msra.mxu0 %v1400
    %1477 = vmatpush.msra.mxu0 %v1399
    %1478 = vmatpush.msra.mxu0 %v1398
    %1479 = vmatpush.msra.mxu0 %v1397
    %1480 = vmatmul.f32.gmra.mxu0 %v1462
    %v1481 = vpop.f32.mrf.mxu0
    %v1482 = vadd.f32 0.0, %v1481
    %1483 = vdwg.mxu0
    %v1484 = vadd.f32 %v1377, %v1482
    %v1485 = vxor.u32 %v1484, 2147483648
    %v1486 = vmul.f32 %v1485, 1.442695
    %v1487 = vpow.pop %v1486
    %v1488 = vadd.f32 %v1487, 1.0
    %v1489 = vrcp.pop %v1488
    %v1490 = vmul.f32 %v1488, %v1489
    %v1491 = vsub.f32 1.0, %v1490
    %v1492 = vmul.f32 %v1489, %v1491
    %v1493 = vadd.f32 %v1489, %v1492
    %vm1494 = vweird.f32 %v1488
    %vm1495 = vweird.f32 %v1489
    %vm1496 = vmor %vm1494, %vm1495
    %v1497 = vsel %vm1496, %v1489, %v1493
    %v1498 = vand.u32 2147483647, %v1488
    %vm1499 = vcmp.eq.f32.partialorder %v1498, 8.507059e+37
    %v1500 = vand.u32 %v1488, 2147483648
    %v1501 = vor.u32 1.1754944e-38, %v1500
    %v1502 = vsel %vm1499, %v1501, %v1497
    %v1503 = vmul.f32 1.0, %v1502
    %v1504 = vtanh.pop %v1484
    %v1505 = vmul.f32 %v1503, %v1452
    %1507 = vrot.lane.b32.xlu0 %v1504, 64
    %v1508 = vpop.permute.xlu0 %1507
    %v1510 = vmul.f32 %v1503, %v1508
    %1512 = vrot.lane.b32.xlu0 %v1510, 32
    %v1513 = vpop.permute.xlu0 %1512
    %v1515 = vadd.f32 %v1505, %v1513
    %v1516 = vtanh.pop %v1515
    %1518 = vrot.lane.b32.xlu0 %v1516, 64
    %v1519 = vpop.permute.xlu0 %1518
    %v1521 = vmul.f32 %v1503, %v1519
    %1523 = vrot.lane.b32.xlu0 %v1521, 32
    %v1524 = vpop.permute.xlu0 %1523
    %v1525 = vsel %vm191, %v1524, 0
    %1527 = vmatpush.msra.mxu0 0.0
    %1528 = vmatpush.msra.mxu0 0.0
    %1529 = vmatpush.msra.mxu0 0.0
    %1530 = vmatpush.msra.mxu0 0.0
    %1531 = vmatpush.msra.mxu0 0.0
    %1532 = vmatpush.msra.mxu0 0.0
    %1533 = vmatpush.msra.mxu0 0.0
    %1534 = vmatpush.msra.mxu0 0.0
    %1535 = vmatpush.msra.mxu0 0.0
    %1536 = vmatpush.msra.mxu0 0.0
    %1537 = vmatpush.msra.mxu0 0.0
    %1538 = vmatpush.msra.mxu0 0.0
    %1539 = vmatpush.msra.mxu0 %v1400
    %1540 = vmatpush.msra.mxu0 %v1399
    %1541 = vmatpush.msra.mxu0 %v1398
    %1542 = vmatpush.msra.mxu0 %v1397
    %1543 = vmatmul.f32.gmra.mxu0 %v1525
    %v1544 = vpop.f32.mrf.mxu0
    %v1545 = vadd.f32 0.0, %v1544
    %1546 = vdwg.mxu0
    %v1547 = vadd.f32 %v1380, %v1545
    %v1548 = vxor.u32 %v1547, 2147483648
    %v1549 = vmul.f32 %v1548, 1.442695
    %v1550 = vpow.pop %v1549
    %v1551 = vadd.f32 %v1550, 1.0
    %v1552 = vrcp.pop %v1551
    %v1553 = vmul.f32 %v1551, %v1552
    %v1554 = vsub.f32 1.0, %v1553
    %v1555 = vmul.f32 %v1552, %v1554
    %v1556 = vadd.f32 %v1552, %v1555
    %vm1557 = vweird.f32 %v1551
    %vm1558 = vweird.f32 %v1552
    %vm1559 = vmor %vm1557, %vm1558
    %v1560 = vsel %vm1559, %v1552, %v1556
    %v1561 = vand.u32 2147483647, %v1551
    %vm1562 = vcmp.eq.f32.partialorder %v1561, 8.507059e+37
    %v1563 = vand.u32 %v1551, 2147483648
    %v1564 = vor.u32 1.1754944e-38, %v1563
    %v1565 = vsel %vm1562, %v1564, %v1560
    %v1566 = vmul.f32 1.0, %v1565
    %v1567 = vtanh.pop %v1547
    %v1568 = vmul.f32 %v1566, %v1515
    %1570 = vrot.lane.b32.xlu0 %v1567, 64
    %v1571 = vpop.permute.xlu0 %1570
    %v1573 = vmul.f32 %v1566, %v1571
    %1575 = vrot.lane.b32.xlu0 %v1573, 32
    %v1576 = vpop.permute.xlu0 %1575
    %v1578 = vadd.f32 %v1568, %v1576
    %v1579 = vtanh.pop %v1578
    %1581 = vrot.lane.b32.xlu0 %v1579, 64
    %v1582 = vpop.permute.xlu0 %1581
    %v1584 = vmul.f32 %v1566, %v1582
    %1586 = vrot.lane.b32.xlu0 %v1584, 32
    %v1587 = vpop.permute.xlu0 %1586
    %v1588 = vsel %vm191, %v1587, 0
    %1590 = vmatpush.msra.mxu0 0.0
    %1591 = vmatpush.msra.mxu0 0.0
    %1592 = vmatpush.msra.mxu0 0.0
    %1593 = vmatpush.msra.mxu0 0.0
    %1594 = vmatpush.msra.mxu0 0.0
    %1595 = vmatpush.msra.mxu0 0.0
    %1596 = vmatpush.msra.mxu0 0.0
    %1597 = vmatpush.msra.mxu0 0.0
    %1598 = vmatpush.msra.mxu0 0.0
    %1599 = vmatpush.msra.mxu0 0.0
    %1600 = vmatpush.msra.mxu0 0.0
    %1601 = vmatpush.msra.mxu0 0.0
    %1602 = vmatpush.msra.mxu0 %v1400
    %1603 = vmatpush.msra.mxu0 %v1399
    %1604 = vmatpush.msra.mxu0 %v1398
    %1605 = vmatpush.msra.mxu0 %v1397
    %1606 = vmatmul.f32.gmra.mxu0 %v1588
    %v1607 = vpop.f32.mrf.mxu0
    %v1608 = vadd.f32 0.0, %v1607
    %1609 = vdwg.mxu0
    %v1610 = vadd.f32 %v1383, %v1608
    %v1611 = vxor.u32 %v1610, 2147483648
    %v1612 = vmul.f32 %v1611, 1.442695
    %v1613 = vpow.pop %v1612
    %v1614 = vadd.f32 %v1613, 1.0
    %v1615 = vrcp.pop %v1614
    %v1616 = vmul.f32 %v1614, %v1615
    %v1617 = vsub.f32 1.0, %v1616
    %v1618 = vmul.f32 %v1615, %v1617
    %v1619 = vadd.f32 %v1615, %v1618
    %vm1620 = vweird.f32 %v1614
    %vm1621 = vweird.f32 %v1615
    %vm1622 = vmor %vm1620, %vm1621
    %v1623 = vsel %vm1622, %v1615, %v1619
    %v1624 = vand.u32 2147483647, %v1614
    %vm1625 = vcmp.eq.f32.partialorder %v1624, 8.507059e+37
    %v1626 = vand.u32 %v1614, 2147483648
    %v1627 = vor.u32 1.1754944e-38, %v1626
    %v1628 = vsel %vm1625, %v1627, %v1623
    %v1629 = vmul.f32 1.0, %v1628
    %v1630 = vtanh.pop %v1610
    %v1631 = vmul.f32 %v1629, %v1578
    %1633 = vrot.lane.b32.xlu0 %v1630, 64
    %v1634 = vpop.permute.xlu0 %1633
    %v1636 = vmul.f32 %v1629, %v1634
    %1638 = vrot.lane.b32.xlu0 %v1636, 32
    %v1639 = vpop.permute.xlu0 %1638
    %v1641 = vadd.f32 %v1631, %v1639
    %v1642 = vtanh.pop %v1641
    %1644 = vrot.lane.b32.xlu0 %v1642, 64
    %v1645 = vpop.permute.xlu0 %1644
    %v1647 = vmul.f32 %v1629, %v1645
    %1649 = vrot.lane.b32.xlu0 %v1647, 32
    %v1650 = vpop.permute.xlu0 %1649
    %v1651 = vsel %vm191, %v1650, 0
    %1653 = vmatpush.msra.mxu0 0.0
    %1654 = vmatpush.msra.mxu0 0.0
    %1655 = vmatpush.msra.mxu0 0.0
    %1656 = vmatpush.msra.mxu0 0.0
    %1657 = vmatpush.msra.mxu0 0.0
    %1658 = vmatpush.msra.mxu0 0.0
    %1659 = vmatpush.msra.mxu0 0.0
    %1660 = vmatpush.msra.mxu0 0.0
    %1661 = vmatpush.msra.mxu0 0.0
    %1662 = vmatpush.msra.mxu0 0.0
    %1663 = vmatpush.msra.mxu0 0.0
    %1664 = vmatpush.msra.mxu0 0.0
    %1665 = vmatpush.msra.mxu0 %v1400
    %1666 = vmatpush.msra.mxu0 %v1399
    %1667 = vmatpush.msra.mxu0 %v1398
    %1668 = vmatpush.msra.mxu0 %v1397
    %1669 = vmatmul.f32.gmra.mxu0 %v1651
    %v1670 = vpop.f32.mrf.mxu0
    %v1671 = vadd.f32 0.0, %v1670
    %1672 = vdwg.mxu0
    %v1673 = vadd.f32 %v1386, %v1671
    %v1674 = vxor.u32 %v1673, 2147483648
    %v1675 = vmul.f32 %v1674, 1.442695
    %v1676 = vpow.pop %v1675
    %v1677 = vadd.f32 %v1676, 1.0
    %v1678 = vrcp.pop %v1677
    %v1679 = vmul.f32 %v1677, %v1678
    %v1680 = vsub.f32 1.0, %v1679
    %v1681 = vmul.f32 %v1678, %v1680
    %v1682 = vadd.f32 %v1678, %v1681
    %vm1683 = vweird.f32 %v1677
    %vm1684 = vweird.f32 %v1678
    %vm1685 = vmor %vm1683, %vm1684
    %v1686 = vsel %vm1685, %v1678, %v1682
    %v1687 = vand.u32 2147483647, %v1677
    %vm1688 = vcmp.eq.f32.partialorder %v1687, 8.507059e+37
    %v1689 = vand.u32 %v1677, 2147483648
    %v1690 = vor.u32 1.1754944e-38, %v1689
    %v1691 = vsel %vm1688, %v1690, %v1686
    %v1692 = vmul.f32 1.0, %v1691
    %v1693 = vtanh.pop %v1673
    %v1694 = vmul.f32 %v1692, %v1641
    %1696 = vrot.lane.b32.xlu0 %v1693, 64
    %v1697 = vpop.permute.xlu0 %1696
    %v1699 = vmul.f32 %v1692, %v1697
    %1701 = vrot.lane.b32.xlu0 %v1699, 32
    %v1702 = vpop.permute.xlu0 %1701
    %v1704 = vadd.f32 %v1694, %v1702
    %v1705 = vtanh.pop %v1704
    %1707 = vrot.lane.b32.xlu0 %v1705, 64
    %v1708 = vpop.permute.xlu0 %1707
    %v1710 = vmul.f32 %v1692, %v1708
    %1712 = vrot.lane.b32.xlu0 %v1710, 32
    %v1713 = vpop.permute.xlu0 %1712
    %v1714 = vsel %vm191, %v1713, 0
    %1716 = vmatpush.msra.mxu0 0.0
    %1717 = vmatpush.msra.mxu0 0.0
    %1718 = vmatpush.msra.mxu0 0.0
    %1719 = vmatpush.msra.mxu0 0.0
    %1720 = vmatpush.msra.mxu0 0.0
    %1721 = vmatpush.msra.mxu0 0.0
    %1722 = vmatpush.msra.mxu0 0.0
    %1723 = vmatpush.msra.mxu0 0.0
    %1724 = vmatpush.msra.mxu0 0.0
    %1725 = vmatpush.msra.mxu0 0.0
    %1726 = vmatpush.msra.mxu0 0.0
    %1727 = vmatpush.msra.mxu0 0.0
    %1728 = vmatpush.msra.mxu0 %v1400
    %1729 = vmatpush.msra.mxu0 %v1399
    %1730 = vmatpush.msra.mxu0 %v1398
    %1731 = vmatpush.msra.mxu0 %v1397
    %1732 = vmatmul.f32.gmra.mxu0 %v1714
    %v1733 = vpop.f32.mrf.mxu0
    %v1734 = vadd.f32 0.0, %v1733
    %1735 = vdwg.mxu0
    %v1736 = vadd.f32 %v1389, %v1734
    %v1737 = vxor.u32 %v1736, 2147483648
    %v1738 = vmul.f32 %v1737, 1.442695
    %v1739 = vpow.pop %v1738
    %v1740 = vadd.f32 %v1739, 1.0
    %v1741 = vrcp.pop %v1740
    %v1742 = vmul.f32 %v1740, %v1741
    %v1743 = vsub.f32 1.0, %v1742
    %v1744 = vmul.f32 %v1741, %v1743
    %v1745 = vadd.f32 %v1741, %v1744
    %vm1746 = vweird.f32 %v1740
    %vm1747 = vweird.f32 %v1741
    %vm1748 = vmor %vm1746, %vm1747
    %v1749 = vsel %vm1748, %v1741, %v1745
    %v1750 = vand.u32 2147483647, %v1740
    %vm1751 = vcmp.eq.f32.partialorder %v1750, 8.507059e+37
    %v1752 = vand.u32 %v1740, 2147483648
    %v1753 = vor.u32 1.1754944e-38, %v1752
    %v1754 = vsel %vm1751, %v1753, %v1749
    %v1755 = vmul.f32 1.0, %v1754
    %v1756 = vtanh.pop %v1736
    %v1757 = vmul.f32 %v1755, %v1704
    %1759 = vrot.lane.b32.xlu0 %v1756, 64
    %v1760 = vpop.permute.xlu0 %1759
    %v1762 = vmul.f32 %v1755, %v1760
    %1764 = vrot.lane.b32.xlu0 %v1762, 32
    %v1765 = vpop.permute.xlu0 %1764
    %v1767 = vadd.f32 %v1757, %v1765
    %v1768 = vtanh.pop %v1767
    %1770 = vrot.lane.b32.xlu0 %v1768, 64
    %v1771 = vpop.permute.xlu0 %1770
    %v1773 = vmul.f32 %v1755, %v1771
    %1775 = vrot.lane.b32.xlu0 %v1773, 32
    %v1776 = vpop.permute.xlu0 %1775
    %v1777 = vsel %vm191, %v1776, 0
    %1779 = vmatpush.msra.mxu0 0.0
    %1780 = vmatpush.msra.mxu0 0.0
    %1781 = vmatpush.msra.mxu0 0.0
    %1782 = vmatpush.msra.mxu0 0.0
    %1783 = vmatpush.msra.mxu0 0.0
    %1784 = vmatpush.msra.mxu0 0.0
    %1785 = vmatpush.msra.mxu0 0.0
    %1786 = vmatpush.msra.mxu0 0.0
    %1787 = vmatpush.msra.mxu0 0.0
    %1788 = vmatpush.msra.mxu0 0.0
    %1789 = vmatpush.msra.mxu0 0.0
    %1790 = vmatpush.msra.mxu0 0.0
    %1791 = vmatpush.msra.mxu0 %v1400
    %1792 = vmatpush.msra.mxu0 %v1399
    %1793 = vmatpush.msra.mxu0 %v1398
    %1794 = vmatpush.msra.mxu0 %v1397
    %1795 = vmatmul.f32.gmra.mxu0 %v1777
    %v1796 = vpop.f32.mrf.mxu0
    %v1797 = vadd.f32 0.0, %v1796
    %1798 = vdwg.mxu0
    %v1799 = vadd.f32 %v1392, %v1797
    %v1800 = vxor.u32 %v1799, 2147483648
    %v1801 = vmul.f32 %v1800, 1.442695
    %v1802 = vpow.pop %v1801
    %v1803 = vadd.f32 %v1802, 1.0
    %v1804 = vrcp.pop %v1803
    %v1805 = vmul.f32 %v1803, %v1804
    %v1806 = vsub.f32 1.0, %v1805
    %v1807 = vmul.f32 %v1804, %v1806
    %v1808 = vadd.f32 %v1804, %v1807
    %vm1809 = vweird.f32 %v1803
    %vm1810 = vweird.f32 %v1804
    %vm1811 = vmor %vm1809, %vm1810
    %v1812 = vsel %vm1811, %v1804, %v1808
    %v1813 = vand.u32 2147483647, %v1803
    %vm1814 = vcmp.eq.f32.partialorder %v1813, 8.507059e+37
    %v1815 = vand.u32 %v1803, 2147483648
    %v1816 = vor.u32 1.1754944e-38, %v1815
    %v1817 = vsel %vm1814, %v1816, %v1812
    %v1818 = vmul.f32 1.0, %v1817
    %v1819 = vtanh.pop %v1799
    %v1820 = vmul.f32 %v1818, %v1767
    %1822 = vrot.lane.b32.xlu0 %v1819, 64
    %v1823 = vpop.permute.xlu0 %1822
    %v1825 = vmul.f32 %v1818, %v1823
    %1827 = vrot.lane.b32.xlu0 %v1825, 32
    %v1828 = vpop.permute.xlu0 %1827
    %v1830 = vadd.f32 %v1820, %v1828
    %v1831 = vtanh.pop %v1830
    %1833 = vrot.lane.b32.xlu0 %v1831, 64
    %v1834 = vpop.permute.xlu0 %1833
    %v1836 = vmul.f32 %v1818, %v1834
    %1838 = vrot.lane.b32.xlu0 %v1836, 32
    %v1839 = vpop.permute.xlu0 %1838
    %v1840 = vsel %vm191, %v1839, 0
    %1842 = vmatpush.msra.mxu0 0.0
    %1843 = vmatpush.msra.mxu0 0.0
    %1844 = vmatpush.msra.mxu0 0.0
    %1845 = vmatpush.msra.mxu0 0.0
    %1846 = vmatpush.msra.mxu0 0.0
    %1847 = vmatpush.msra.mxu0 0.0
    %1848 = vmatpush.msra.mxu0 0.0
    %1849 = vmatpush.msra.mxu0 0.0
    %1850 = vmatpush.msra.mxu0 0.0
    %1851 = vmatpush.msra.mxu0 0.0
    %1852 = vmatpush.msra.mxu0 0.0
    %1853 = vmatpush.msra.mxu0 0.0
    %1854 = vmatpush.msra.mxu0 %v1400
    %1855 = vmatpush.msra.mxu0 %v1399
    %1856 = vmatpush.msra.mxu0 %v1398
    %1857 = vmatpush.msra.mxu0 %v1397
    %1858 = vmatmul.f32.gmra.mxu0 %v1840
    %v1859 = vpop.f32.mrf.mxu0
    %v1860 = vadd.f32 0.0, %v1859
    %1861 = vdwg.mxu0
    %v1862 = vadd.f32 %v1395, %v1860
    %v1863 = vxor.u32 %v1862, 2147483648
    %v1864 = vmul.f32 %v1863, 1.442695
    %v1865 = vpow.pop %v1864
    %v1866 = vadd.f32 %v1865, 1.0
    %v1867 = vrcp.pop %v1866
    %v1868 = vmul.f32 %v1866, %v1867
    %v1869 = vsub.f32 1.0, %v1868
    %v1870 = vmul.f32 %v1867, %v1869
    %v1871 = vadd.f32 %v1867, %v1870
    %vm1872 = vweird.f32 %v1866
    %vm1873 = vweird.f32 %v1867
    %vm1874 = vmor %vm1872, %vm1873
    %v1875 = vsel %vm1874, %v1867, %v1871
    %v1876 = vand.u32 2147483647, %v1866
    %vm1877 = vcmp.eq.f32.partialorder %v1876, 8.507059e+37
    %v1878 = vand.u32 %v1866, 2147483648
    %v1879 = vor.u32 1.1754944e-38, %v1878
    %v1880 = vsel %vm1877, %v1879, %v1875
    %v1881 = vmul.f32 1.0, %v1880
    %v1882 = vtanh.pop %v1862
    %v1883 = vmul.f32 %v1881, %v1830
    %1885 = vrot.lane.b32.xlu0 %v1882, 64
    %v1886 = vpop.permute.xlu0 %1885
    %v1888 = vmul.f32 %v1881, %v1886
    %1890 = vrot.lane.b32.xlu0 %v1888, 32
    %v1891 = vpop.permute.xlu0 %1890
    %v1893 = vadd.f32 %v1883, %v1891
    %v1894 = vtanh.pop %v1893
    %1896 = vrot.lane.b32.xlu0 %v1894, 64
    %v1897 = vpop.permute.xlu0 %1896
    %v1899 = vmul.f32 %v1881, %v1897
    %v1900 = vld [vmem:[%s9] sm:$0x1]
    %v1902 = vperm.slane %v1900, 0
    %1903 = vrot.lane.b32.xlu0 %v1902, 96
    %v1904 = vpop.permute.xlu0 %1903
    %v1906 = vmul.f32 %v1899, %v1904
    %1908 = vrot.lane.b32.xlu0 %v1906, 32
    %v1909 = vpop.permute.xlu0 %1908
    %v1911 = vsel %vm191, %v1909, 0.0
    %1912 = vadd.xlane.f32.xlu0 %v1911
    %v1913 = vpop.xlane.xlu0 %1912
    %v1914 = vld [vmem:[#allocation3] sm:$0x1]
    %v1916 = vperm.slane %v1914, 0
    %v1918 = vadd.f32 %v1913, %v1916
    %vm1919 = vcmask 7168
    %1920 = vst.msk [vmem:[%s11] sm:$0xff] %vm1919, %v1918
    // Predicated region
    $region50: #{discriminator_forward.1} parent=1 // pred_check
      _
    $region51: #{discriminator_forward.1} parent=1 // pred_check_branch
      %1922 = sbr.rel (0) target = $region53
    $region52: #{discriminator_forward.1} parent=1 // pred_region
      _
    $region53: #{discriminator_forward.1} parent=1 // pred_fallthru
      _
    // Predicated region
    $region54: #{discriminator_forward.1} parent=1 // pred_check
      _
    $region55: #{discriminator_forward.1} parent=1 // pred_check_branch
      %1924 = sbr.rel (0) target = $region57
    $region56: #{discriminator_forward.1} parent=1 // pred_region
      _
    $region57: #{discriminator_forward.1} parent=1 // pred_fallthru
      _
    %1925 = vsyncpa [#allocation5], 1

</llo_original>
